<compile_context>
chip_gen: v6e
topology: v6e:2x2x1
jax: 0.10.0
libtpu: 0.0.40
codegen_flags: <defaults>
</compile_context>

<pallas_src>
import math
import functools

import jax
import jax.numpy as jnp
from jax.experimental import pallas as pl
from jax.experimental.pallas import tpu as pltpu


def _mha_ff1_kernel(x_ref, f_ref, gamma_ref, beta_ref,
                    wq_ref, bq_ref, wkv_ref, bkv_ref, wo_ref, bo_ref,
                    o_ref, attn_ref, *,
                    num_heads, batch_block, lq, lk, approx_recip, mxu_dtype):
    D = x_ref.shape[-1]
    dk = D // num_heads
    eps = 1e-6
    scale = 1.0 / math.sqrt(dk)

    if mxu_dtype is None:
        cast = lambda t: t
    else:
        cast = lambda t: t.astype(mxu_dtype)

    x = x_ref[...].astype(jnp.float32)          # (bb*Lq, D)
    f = f_ref[...].astype(jnp.float32)          # (bb*Lk, D)

    # ---- LayerNorm over every row of the batch block (annotated transformer:
    #      unbiased (D-1) variance, divide by std + eps) ----
    mean = jnp.mean(x, axis=-1, keepdims=True)
    diff = x - mean
    var_unb = jnp.sum(diff * diff, axis=-1, keepdims=True) * (1.0 / (D - 1))
    inv_std = pl.reciprocal(jnp.sqrt(var_unb) + eps, approx=approx_recip)
    ln = gamma_ref[...] * (diff * inv_std) + beta_ref[...]

    # ---- Projections over the whole row block: Q (with 1/sqrt(dk) folded in)
    #      and fused K|V (one MXU weight push, 2D-wide N) ----
    q = (jnp.dot(cast(ln), wq_ref[...], preferred_element_type=jnp.float32)
         + bq_ref[...]) * scale                                     # (bb*Lq, D)
    kv = (jnp.dot(cast(f), wkv_ref[...], preferred_element_type=jnp.float32)
          + bkv_ref[...])                                           # (bb*Lk, 2D)

    q3 = q.reshape(batch_block, lq, D)                              # (bb, Lq, D)
    kv3 = kv.reshape(batch_block, lk, 2 * D)                        # (bb, Lk, 2D)

    # ---- Attention: batched over the batch block with 3-D einsums; only a
    #      small static head loop remains (static lane offsets, results stored
    #      to scratch each iteration so vreg live ranges stay bounded) ----
    for h in range(num_heads):
        lo = h * dk
        qh = q3[:, :, lo:lo + dk]                                   # (bb, Lq, dk)
        kh = kv3[:, :, lo:lo + dk]                                  # (bb, Lk, dk)
        vh = kv3[:, :, D + lo:D + lo + dk]                          # (bb, Lk, dk)

        s = jnp.einsum('bqd,bkd->bqk', cast(qh), cast(kh),
                       preferred_element_type=jnp.float32)          # (bb, Lq, Lk)
        s = s - jnp.max(s, axis=-1, keepdims=True)
        p = jnp.exp(s)
        inv_sum = pl.reciprocal(jnp.sum(p, axis=-1, keepdims=True),
                                approx=approx_recip)                # (bb, Lq, 1)
        pv = jnp.einsum('bqk,bkd->bqd', cast(p), cast(vh),
                        preferred_element_type=jnp.float32)         # (bb, Lq, dk)
        # Normalise after PV (Lq x dk multiplies instead of Lq x Lk), write the
        # head's output into its lane slot of the assembled attention buffer.
        attn_ref[:, :, lo:lo + dk] = pv * inv_sum

    # ---- Single full-K output projection + residual + bias (added once) ----
    attn2d = attn_ref[...].reshape(batch_block * lq, D)
    out = x + bo_ref[...] + jnp.dot(cast(attn2d), wo_ref[...],
                                    preferred_element_type=jnp.float32)
    o_ref[...] = out.astype(o_ref.dtype)
    # NOTE: dropout is identity in eval mode; mask is None in this forward.


def _pick_batch_block(batch, lq, target_rows=512, min_grid=2):
    """Largest divisor of `batch` keeping <= target_rows rows per grid step while
    keeping the grid length >= min_grid when possible (two TensorCores on v7x).
    An even grid length is preferable for v7x load balance."""
    max_bb = max(1, target_rows // max(lq, 1))
    best = 1
    for bb in range(1, batch + 1):
        if batch % bb or bb > max_bb:
            continue
        if batch >= min_grid and (batch // bb) < min_grid:
            continue
        best = bb
    return best


def _vmem_limit_bytes():
    """Generation-aware scoped-VMEM budget: ~75% of physical VMEM
    (~96 MiB on v5e/v6e, ~48 MiB on v7x), conservative fallback otherwise."""
    phys = 64 * 1024 * 1024
    try:
        info = pltpu.get_tpu_info()
        phys = int(getattr(info, "vmem_capacity_bytes", phys))
    except Exception:
        pass
    return int(phys * 3 // 4)


def mha_ff1(x, feats, params, *, num_heads, batch_block=None, target_rows=512,
            approx_recip=False, mxu_dtype=None, weight_pipeline_mode=None):
    gamma, beta, wq, bq, wk, bk, wv, bv, wo, bo = params
    B, Lq, D = x.shape
    _, Lk, _ = feats.shape
    assert D % num_heads == 0

    bb = batch_block if batch_block is not None else _pick_batch_block(B, Lq, target_rows)
    assert B % bb == 0
    nb = B // bb

    # Fold batch into the row (M / sublane) dimension of every projection.
    x2d = x.reshape(B * Lq, D)
    f2d = feats.reshape(B * Lk, D)
    # Fuse the K and V projections into one (D, 2D) weight / (1, 2D) bias.
    wkv = jnp.concatenate([wk, wv], axis=1)
    bkv = jnp.concatenate([bk, bv], axis=1)

    # Pre-cast weights (only) to the MXU dtype; biases and all elementwise math
    # stay f32, accumulation stays f32.
    if mxu_dtype is not None:
        wq_m, wkv_m, wo_m = (w.astype(mxu_dtype) for w in (wq, wkv, wo))
    else:
        wq_m, wkv_m, wo_m = wq, wkv, wo

    kernel = functools.partial(
        _mha_ff1_kernel, num_heads=num_heads, batch_block=bb, lq=Lq, lk=Lk,
        approx_recip=approx_recip, mxu_dtype=mxu_dtype)

    def const_spec(shape):
        # Grid-invariant block.  Pass weight_pipeline_mode=pl.Buffered(1) in
        # production to single-buffer these (halves weight VMEM footprint).
        if weight_pipeline_mode is None:
            return pl.BlockSpec(shape, lambda i: (0, 0))
        return pl.BlockSpec(shape, lambda i: (0, 0),
                            pipeline_mode=weight_pipeline_mode)

    flops = int(2 * B * Lq * D * D            # Q projection
                + 2 * B * Lk * D * 2 * D      # fused K|V projection
                + 4 * B * Lq * Lk * D         # scores + P@V (all heads)
                + 2 * B * Lq * D * D)         # single Wo projection
    transcendentals = int(B * num_heads * Lq * Lk)     # softmax exp
    bytes_accessed = int(x.dtype.itemsize * (x2d.size + f2d.size + B * Lq * D)
                         + 4 * (gamma.size + beta.size + bq.size + bkv.size + bo.size)
                         + wq_m.dtype.itemsize * (wq_m.size + wkv_m.size + wo_m.size))

    out2d = pl.pallas_call(
        kernel,
        out_shape=jax.ShapeDtypeStruct((B * Lq, D), x.dtype),
        grid=(nb,),
        in_specs=[
            pl.BlockSpec((bb * Lq, D), lambda i: (i, 0)),   # x rows
            pl.BlockSpec((bb * Lk, D), lambda i: (i, 0)),   # feats rows
            const_spec((1, D)),                             # gamma
            const_spec((1, D)),                             # beta
            const_spec((D, D)),                             # Wq
            const_spec((1, D)),                             # bq
            const_spec((D, 2 * D)),                         # W(k|v) fused
            const_spec((1, 2 * D)),                         # b(k|v) fused
            const_spec((D, D)),                             # Wo
            const_spec((1, D)),                             # bo
        ],
        out_specs=pl.BlockSpec((bb * Lq, D), lambda i: (i, 0)),
        scratch_shapes=[pltpu.VMEM((bb, Lq, D), jnp.float32)],   # assembled heads
        compiler_params=pltpu.CompilerParams(
            dimension_semantics=("parallel",),
            vmem_limit_bytes=_vmem_limit_bytes()),
        cost_estimate=pl.CostEstimate(flops=flops,
                                      transcendentals=transcendentals,
                                      bytes_accessed=bytes_accessed),
    )(x2d, f2d, gamma, beta, wq_m, bq, wkv_m, bkv, wo_m, bo)

    return out2d.reshape(B, Lq, D)


def mha_ff1_reference(x, feats, params, *, num_heads):
    """Pure-JAX reference mirroring the PyTorch forward (eval mode)."""
    gamma, beta, wq, bq, wk, bk, wv, bv, wo, bo = params
    B, Lq, D = x.shape
    dk = D // num_heads
    eps = 1e-6

    mean = jnp.mean(x, axis=-1, keepdims=True)
    diff = x - mean
    std = jnp.sqrt(jnp.sum(diff * diff, axis=-1, keepdims=True) / (D - 1))
    ln = gamma * diff / (std + eps) + beta

    q = ln @ wq + bq
    k = feats @ wk + bk
    v = feats @ wv + bv

    def split(t):  # (B, L, D) -> (B, h, L, dk)
        return t.reshape(t.shape[0], t.shape[1], num_heads, dk).transpose(0, 2, 1, 3)

    qh, kh, vh = split(q), split(k), split(v)
    s = jnp.einsum('bhqd,bhkd->bhqk', qh, kh) / math.sqrt(dk)
    p = jax.nn.softmax(s, axis=-1)
    o = jnp.einsum('bhqk,bhkd->bhqd', p, vh)
    o = o.transpose(0, 2, 1, 3).reshape(B, Lq, D)
    return x + (o @ wo + bo)


def _make_params(key, D):
    ks = jax.random.split(key, 10)
    gamma = 1.0 + 0.1 * jax.random.normal(ks[0], (1, D), jnp.float32)
    beta = 0.1 * jax.random.normal(ks[1], (1, D), jnp.float32)
    wq = 0.05 * jax.random.normal(ks[2], (D, D), jnp.float32)
    bq = 0.05 * jax.random.normal(ks[3], (1, D), jnp.float32)
    wk = 0.05 * jax.random.normal(ks[4], (D, D), jnp.float32)
    bk = 0.05 * jax.random.normal(ks[5], (1, D), jnp.float32)
    wv = 0.05 * jax.random.normal(ks[6], (D, D), jnp.float32)
    bv = 0.05 * jax.random.normal(ks[7], (1, D), jnp.float32)
    wo = 0.05 * jax.random.normal(ks[8], (D, D), jnp.float32)
    bo = 0.05 * jax.random.normal(ks[9], (1, D), jnp.float32)
    return (gamma, beta, wq, bq, wk, bk, wv, bv, wo, bo)


if __name__ == "__main__":
    key = jax.random.PRNGKey(0)
    configs = [
        dict(B=2, Lq=8, Lk=16, D=32, H=4),    # toy shape (grid of 2, bb=1)
        dict(B=8, Lq=8, Lk=32, D=64, H=8),    # exercises bb>1 row blocks
    ]
    for cfg in configs:
        B, Lq, Lk, D, H = cfg["B"], cfg["Lq"], cfg["Lk"], cfg["D"], cfg["H"]
        key, kx, kf, kp = jax.random.split(key, 4)
        x = jax.random.normal(kx, (B, Lq, D), jnp.float32)
        feats = jax.random.normal(kf, (B, Lk, D), jnp.float32)
        params = _make_params(kp, D)

        out = jax.block_until_ready(mha_ff1(x, feats, params, num_heads=H))
        ref = mha_ff1_reference(x, feats, params, num_heads=H)
        assert out.shape == (B, Lq, D)
        assert jnp.allclose(out, ref, atol=1e-4, rtol=1e-4), f"mismatch vs reference: {cfg}"

    print("KERNEL_OK")
</pallas_src>

<mosaic_0001>
module attributes {stable_mosaic.version = 11 : i64} {
  func.func @_mha_ff1_kernel(%arg0: i32, %arg1: memref<8x32xf32, #tpu.memory_space<vmem>>, %arg2: memref<16x32xf32, #tpu.memory_space<vmem>>, %arg3: memref<1x32xf32, #tpu.memory_space<vmem>>, %arg4: memref<1x32xf32, #tpu.memory_space<vmem>>, %arg5: memref<32x32xf32, #tpu.memory_space<vmem>>, %arg6: memref<1x32xf32, #tpu.memory_space<vmem>>, %arg7: memref<32x64xf32, #tpu.memory_space<vmem>>, %arg8: memref<1x64xf32, #tpu.memory_space<vmem>>, %arg9: memref<32x32xf32, #tpu.memory_space<vmem>>, %arg10: memref<1x32xf32, #tpu.memory_space<vmem>>, %arg11: memref<8x32xf32, #tpu.memory_space<vmem>>, %arg12: memref<1x8x32xf32, #tpu.memory_space<vmem>>) attributes {dimension_semantics = [#tpu.dimension_semantics<parallel>], iteration_bounds = array<i64: 2>, scalar_prefetch = 0 : i64, scratch_operands = 1 : i64, tpu.core_type = #tpu.core_type<tc>, window_params = [{transform_indices = @transform_0, window_bounds = array<i64: 8, 32>}, {transform_indices = @transform_1, window_bounds = array<i64: 16, 32>}, {pipeline_mode = #tpu.pipeline_mode<synchronous>, transform_indices = @transform_2, window_bounds = array<i64: 1, 32>}, {pipeline_mode = #tpu.pipeline_mode<synchronous>, transform_indices = @transform_3, window_bounds = array<i64: 1, 32>}, {pipeline_mode = #tpu.pipeline_mode<synchronous>, transform_indices = @transform_4, window_bounds = array<i64: 32, 32>}, {pipeline_mode = #tpu.pipeline_mode<synchronous>, transform_indices = @transform_5, window_bounds = array<i64: 1, 32>}, {pipeline_mode = #tpu.pipeline_mode<synchronous>, transform_indices = @transform_6, window_bounds = array<i64: 32, 64>}, {pipeline_mode = #tpu.pipeline_mode<synchronous>, transform_indices = @transform_7, window_bounds = array<i64: 1, 64>}, {pipeline_mode = #tpu.pipeline_mode<synchronous>, transform_indices = @transform_8, window_bounds = array<i64: 32, 32>}, {pipeline_mode = #tpu.pipeline_mode<synchronous>, transform_indices = @transform_9, window_bounds = array<i64: 1, 32>}, {transform_indices = @transform_10, window_bounds = array<i64: 8, 32>}]} {
    %c0 = arith.constant 0 : index
    %c0_0 = arith.constant 0 : index
    %0 = vector.load %arg1[%c0, %c0_0] : memref<8x32xf32, #tpu.memory_space<vmem>>, vector<8x32xf32>
    %c0_1 = arith.constant 0 : index
    %c0_2 = arith.constant 0 : index
    %1 = vector.load %arg2[%c0_1, %c0_2] : memref<16x32xf32, #tpu.memory_space<vmem>>, vector<16x32xf32>
    %cst = arith.constant dense<0.000000e+00> : vector<8xf32>
    %2 = vector.multi_reduction <add>, %0, %cst [1] : vector<8x32xf32> to vector<8xf32>
    %3 = vector.shape_cast %2 : vector<8xf32> to vector<8x1xf32>
    %cst_3 = arith.constant 3.200000e+01 : f32
    %4 = vector.broadcast %cst_3 : f32 to vector<8x1xf32>
    %5 = arith.divf %3, %4 : vector<8x1xf32>
    %6 = vector.broadcast %5 : vector<8x1xf32> to vector<8x32xf32>
    %7 = arith.subf %0, %6 : vector<8x32xf32>
    %8 = arith.mulf %7, %7 : vector<8x32xf32>
    %cst_4 = arith.constant dense<0.000000e+00> : vector<8xf32>
    %9 = vector.multi_reduction <add>, %8, %cst_4 [1] : vector<8x32xf32> to vector<8xf32>
    %10 = vector.shape_cast %9 : vector<8xf32> to vector<8x1xf32>
    %cst_5 = arith.constant 0.0322580636 : f32
    %11 = vector.broadcast %cst_5 : f32 to vector<8x1xf32>
    %12 = arith.mulf %10, %11 : vector<8x1xf32>
    %13 = math.sqrt %12 : vector<8x1xf32>
    %cst_6 = arith.constant 9.99999997E-7 : f32
    %14 = vector.broadcast %cst_6 : f32 to vector<8x1xf32>
    %15 = arith.addf %13, %14 : vector<8x1xf32>
    %16 = tpu.reciprocal %15 : vector<8x1xf32> -> vector<8x1xf32>
    %c0_7 = arith.constant 0 : index
    %c0_8 = arith.constant 0 : index
    %17 = vector.load %arg3[%c0_7, %c0_8] : memref<1x32xf32, #tpu.memory_space<vmem>>, vector<1x32xf32>
    %18 = vector.broadcast %16 : vector<8x1xf32> to vector<8x32xf32>
    %19 = arith.mulf %7, %18 : vector<8x32xf32>
    %20 = vector.broadcast %17 : vector<1x32xf32> to vector<8x32xf32>
    %21 = arith.mulf %20, %19 : vector<8x32xf32>
    %c0_9 = arith.constant 0 : index
    %c0_10 = arith.constant 0 : index
    %22 = vector.load %arg4[%c0_9, %c0_10] : memref<1x32xf32, #tpu.memory_space<vmem>>, vector<1x32xf32>
    %23 = vector.broadcast %22 : vector<1x32xf32> to vector<8x32xf32>
    %24 = arith.addf %21, %23 : vector<8x32xf32>
    %c0_11 = arith.constant 0 : index
    %c0_12 = arith.constant 0 : index
    %25 = vector.load %arg5[%c0_11, %c0_12] : memref<32x32xf32, #tpu.memory_space<vmem>>, vector<32x32xf32>
    %cst_13 = arith.constant dense<0.000000e+00> : vector<8x32xf32>
    %26 = tpu.matmul %24, %25, %cst_13 {dimension_numbers = #tpu.dot_dimension_numbers<[1], [0], [0], [1], [0, 0, 1, 1], [], []>} : vector<8x32xf32>, vector<32x32xf32>, vector<8x32xf32> -> vector<8x32xf32>
    %c0_14 = arith.constant 0 : index
    %c0_15 = arith.constant 0 : index
    %27 = vector.load %arg6[%c0_14, %c0_15] : memref<1x32xf32, #tpu.memory_space<vmem>>, vector<1x32xf32>
    %28 = vector.broadcast %27 : vector<1x32xf32> to vector<8x32xf32>
    %29 = arith.addf %26, %28 : vector<8x32xf32>
    %cst_16 = arith.constant 0.353553385 : f32
    %30 = vector.broadcast %cst_16 : f32 to vector<8x32xf32>
    %31 = arith.mulf %29, %30 : vector<8x32xf32>
    %c0_17 = arith.constant 0 : index
    %c0_18 = arith.constant 0 : index
    %32 = vector.load %arg7[%c0_17, %c0_18] : memref<32x64xf32, #tpu.memory_space<vmem>>, vector<32x64xf32>
    %cst_19 = arith.constant dense<0.000000e+00> : vector<16x64xf32>
    %33 = tpu.matmul %1, %32, %cst_19 {dimension_numbers = #tpu.dot_dimension_numbers<[1], [0], [0], [1], [0, 0, 1, 1], [], []>} : vector<16x32xf32>, vector<32x64xf32>, vector<16x64xf32> -> vector<16x64xf32>
    %c0_20 = arith.constant 0 : index
    %c0_21 = arith.constant 0 : index
    %34 = vector.load %arg8[%c0_20, %c0_21] : memref<1x64xf32, #tpu.memory_space<vmem>>, vector<1x64xf32>
    %35 = vector.broadcast %34 : vector<1x64xf32> to vector<16x64xf32>
    %36 = arith.addf %33, %35 : vector<16x64xf32>
    %37 = vector.shape_cast %31 : vector<8x32xf32> to vector<1x8x32xf32>
    %38 = vector.shape_cast %36 : vector<16x64xf32> to vector<1x16x64xf32>
    %39 = vector.extract_strided_slice %37 {offsets = [0, 0, 0], sizes = [1, 8, 8], strides = [1, 1, 1]} : vector<1x8x32xf32> to vector<1x8x8xf32>
    %40 = vector.extract_strided_slice %38 {offsets = [0, 0, 0], sizes = [1, 16, 8], strides = [1, 1, 1]} : vector<1x16x64xf32> to vector<1x16x8xf32>
    %41 = vector.extract_strided_slice %38 {offsets = [0, 0, 32], sizes = [1, 16, 8], strides = [1, 1, 1]} : vector<1x16x64xf32> to vector<1x16x8xf32>
    "tpu.trace_start"() <{level = 10 : i32, message = "bqd,bkd->bqk"}> : () -> ()
    %cst_22 = arith.constant dense<0.000000e+00> : vector<1x8x16xf32>
    %42 = tpu.matmul %39, %40, %cst_22 {dimension_numbers = #tpu.dot_dimension_numbers<[2], [2], [1], [1], [0, 0, 0, 1, 1, 1], [0], [0]>} : vector<1x8x8xf32>, vector<1x16x8xf32>, vector<1x8x16xf32> -> vector<1x8x16xf32>
    "tpu.trace_stop"() : () -> ()
    %cst_23 = arith.constant dense<0xFF800000> : vector<1x8xf32>
    %43 = vector.multi_reduction <maximumf>, %42, %cst_23 [2] : vector<1x8x16xf32> to vector<1x8xf32>
    %44 = vector.shape_cast %43 : vector<1x8xf32> to vector<1x8x1xf32>
    %45 = vector.broadcast %44 : vector<1x8x1xf32> to vector<1x8x16xf32>
    %46 = arith.subf %42, %45 : vector<1x8x16xf32>
    %47 = math.exp %46 : vector<1x8x16xf32>
    %cst_24 = arith.constant dense<0.000000e+00> : vector<1x8xf32>
    %48 = vector.multi_reduction <add>, %47, %cst_24 [2] : vector<1x8x16xf32> to vector<1x8xf32>
    %49 = vector.shape_cast %48 : vector<1x8xf32> to vector<1x8x1xf32>
    %50 = tpu.reciprocal %49 : vector<1x8x1xf32> -> vector<1x8x1xf32>
    "tpu.trace_start"() <{level = 10 : i32, message = "bqk,bkd->bqd"}> : () -> ()
    %cst_25 = arith.constant dense<0.000000e+00> : vector<1x8x8xf32>
    %51 = tpu.matmul %47, %41, %cst_25 {dimension_numbers = #tpu.dot_dimension_numbers<[2], [1], [1], [2], [0, 0, 0, 1, 1, 2], [0], [0]>} : vector<1x8x16xf32>, vector<1x16x8xf32>, vector<1x8x8xf32> -> vector<1x8x8xf32>
    "tpu.trace_stop"() : () -> ()
    %52 = vector.broadcast %50 : vector<1x8x1xf32> to vector<1x8x8xf32>
    %53 = arith.mulf %51, %52 : vector<1x8x8xf32>
    %c0_26 = arith.constant 0 : index
    %c0_27 = arith.constant 0 : index
    %c0_28 = arith.constant 0 : index
    %54 = vector.load %arg12[%c0_26, %c0_27, %c0_28] : memref<1x8x32xf32, #tpu.memory_space<vmem>>, vector<1x8x8xf32>
    tpu.vector_store %arg12[%c0_26, %c0_27, %c0_28], %53 {strides = array<i32>} : memref<1x8x32xf32, #tpu.memory_space<vmem>>, vector<1x8x8xf32>,
    %55 = vector.extract_strided_slice %37 {offsets = [0, 0, 8], sizes = [1, 8, 8], strides = [1, 1, 1]} : vector<1x8x32xf32> to vector<1x8x8xf32>
    %56 = vector.extract_strided_slice %38 {offsets = [0, 0, 8], sizes = [1, 16, 8], strides = [1, 1, 1]} : vector<1x16x64xf32> to vector<1x16x8xf32>
    %57 = vector.extract_strided_slice %38 {offsets = [0, 0, 40], sizes = [1, 16, 8], strides = [1, 1, 1]} : vector<1x16x64xf32> to vector<1x16x8xf32>
    "tpu.trace_start"() <{level = 10 : i32, message = "bqd,bkd->bqk"}> : () -> ()
    %cst_29 = arith.constant dense<0.000000e+00> : vector<1x8x16xf32>
    %58 = tpu.matmul %55, %56, %cst_29 {dimension_numbers = #tpu.dot_dimension_numbers<[2], [2], [1], [1], [0, 0, 0, 1, 1, 1], [0], [0]>} : vector<1x8x8xf32>, vector<1x16x8xf32>, vector<1x8x16xf32> -> vector<1x8x16xf32>
    "tpu.trace_stop"() : () -> ()
    %cst_30 = arith.constant dense<0xFF800000> : vector<1x8xf32>
    %59 = vector.multi_reduction <maximumf>, %58, %cst_30 [2] : vector<1x8x16xf32> to vector<1x8xf32>
    %60 = vector.shape_cast %59 : vector<1x8xf32> to vector<1x8x1xf32>
    %61 = vector.broadcast %60 : vector<1x8x1xf32> to vector<1x8x16xf32>
    %62 = arith.subf %58, %61 : vector<1x8x16xf32>
    %63 = math.exp %62 : vector<1x8x16xf32>
    %cst_31 = arith.constant dense<0.000000e+00> : vector<1x8xf32>
    %64 = vector.multi_reduction <add>, %63, %cst_31 [2] : vector<1x8x16xf32> to vector<1x8xf32>
    %65 = vector.shape_cast %64 : vector<1x8xf32> to vector<1x8x1xf32>
    %66 = tpu.reciprocal %65 : vector<1x8x1xf32> -> vector<1x8x1xf32>
    "tpu.trace_start"() <{level = 10 : i32, message = "bqk,bkd->bqd"}> : () -> ()
    %cst_32 = arith.constant dense<0.000000e+00> : vector<1x8x8xf32>
    %67 = tpu.matmul %63, %57, %cst_32 {dimension_numbers = #tpu.dot_dimension_numbers<[2], [1], [1], [2], [0, 0, 0, 1, 1, 2], [0], [0]>} : vector<1x8x16xf32>, vector<1x16x8xf32>, vector<1x8x8xf32> -> vector<1x8x8xf32>
    "tpu.trace_stop"() : () -> ()
    %68 = vector.broadcast %66 : vector<1x8x1xf32> to vector<1x8x8xf32>
    %69 = arith.mulf %67, %68 : vector<1x8x8xf32>
    %c0_33 = arith.constant 0 : index
    %c0_34 = arith.constant 0 : index
    %c8 = arith.constant 8 : index
    %70 = vector.load %arg12[%c0_33, %c0_34, %c8] : memref<1x8x32xf32, #tpu.memory_space<vmem>>, vector<1x8x8xf32>
    tpu.vector_store %arg12[%c0_33, %c0_34, %c8], %69 {strides = array<i32>} : memref<1x8x32xf32, #tpu.memory_space<vmem>>, vector<1x8x8xf32>,
    %71 = vector.extract_strided_slice %37 {offsets = [0, 0, 16], sizes = [1, 8, 8], strides = [1, 1, 1]} : vector<1x8x32xf32> to vector<1x8x8xf32>
    %72 = vector.extract_strided_slice %38 {offsets = [0, 0, 16], sizes = [1, 16, 8], strides = [1, 1, 1]} : vector<1x16x64xf32> to vector<1x16x8xf32>
    %73 = vector.extract_strided_slice %38 {offsets = [0, 0, 48], sizes = [1, 16, 8], strides = [1, 1, 1]} : vector<1x16x64xf32> to vector<1x16x8xf32>
    "tpu.trace_start"() <{level = 10 : i32, message = "bqd,bkd->bqk"}> : () -> ()
    %cst_35 = arith.constant dense<0.000000e+00> : vector<1x8x16xf32>
    %74 = tpu.matmul %71, %72, %cst_35 {dimension_numbers = #tpu.dot_dimension_numbers<[2], [2], [1], [1], [0, 0, 0, 1, 1, 1], [0], [0]>} : vector<1x8x8xf32>, vector<1x16x8xf32>, vector<1x8x16xf32> -> vector<1x8x16xf32>
    "tpu.trace_stop"() : () -> ()
    %cst_36 = arith.constant dense<0xFF800000> : vector<1x8xf32>
    %75 = vector.multi_reduction <maximumf>, %74, %cst_36 [2] : vector<1x8x16xf32> to vector<1x8xf32>
    %76 = vector.shape_cast %75 : vector<1x8xf32> to vector<1x8x1xf32>
    %77 = vector.broadcast %76 : vector<1x8x1xf32> to vector<1x8x16xf32>
    %78 = arith.subf %74, %77 : vector<1x8x16xf32>
    %79 = math.exp %78 : vector<1x8x16xf32>
    %cst_37 = arith.constant dense<0.000000e+00> : vector<1x8xf32>
    %80 = vector.multi_reduction <add>, %79, %cst_37 [2] : vector<1x8x16xf32> to vector<1x8xf32>
    %81 = vector.shape_cast %80 : vector<1x8xf32> to vector<1x8x1xf32>
    %82 = tpu.reciprocal %81 : vector<1x8x1xf32> -> vector<1x8x1xf32>
    "tpu.trace_start"() <{level = 10 : i32, message = "bqk,bkd->bqd"}> : () -> ()
    %cst_38 = arith.constant dense<0.000000e+00> : vector<1x8x8xf32>
    %83 = tpu.matmul %79, %73, %cst_38 {dimension_numbers = #tpu.dot_dimension_numbers<[2], [1], [1], [2], [0, 0, 0, 1, 1, 2], [0], [0]>} : vector<1x8x16xf32>, vector<1x16x8xf32>, vector<1x8x8xf32> -> vector<1x8x8xf32>
    "tpu.trace_stop"() : () -> ()
    %84 = vector.broadcast %82 : vector<1x8x1xf32> to vector<1x8x8xf32>
    %85 = arith.mulf %83, %84 : vector<1x8x8xf32>
    %c0_39 = arith.constant 0 : index
    %c0_40 = arith.constant 0 : index
    %c16 = arith.constant 16 : index
    %86 = vector.load %arg12[%c0_39, %c0_40, %c16] : memref<1x8x32xf32, #tpu.memory_space<vmem>>, vector<1x8x8xf32>
    tpu.vector_store %arg12[%c0_39, %c0_40, %c16], %85 {strides = array<i32>} : memref<1x8x32xf32, #tpu.memory_space<vmem>>, vector<1x8x8xf32>,
    %87 = vector.extract_strided_slice %37 {offsets = [0, 0, 24], sizes = [1, 8, 8], strides = [1, 1, 1]} : vector<1x8x32xf32> to vector<1x8x8xf32>
    %88 = vector.extract_strided_slice %38 {offsets = [0, 0, 24], sizes = [1, 16, 8], strides = [1, 1, 1]} : vector<1x16x64xf32> to vector<1x16x8xf32>
    %89 = vector.extract_strided_slice %38 {offsets = [0, 0, 56], sizes = [1, 16, 8], strides = [1, 1, 1]} : vector<1x16x64xf32> to vector<1x16x8xf32>
    "tpu.trace_start"() <{level = 10 : i32, message = "bqd,bkd->bqk"}> : () -> ()
    %cst_41 = arith.constant dense<0.000000e+00> : vector<1x8x16xf32>
    %90 = tpu.matmul %87, %88, %cst_41 {dimension_numbers = #tpu.dot_dimension_numbers<[2], [2], [1], [1], [0, 0, 0, 1, 1, 1], [0], [0]>} : vector<1x8x8xf32>, vector<1x16x8xf32>, vector<1x8x16xf32> -> vector<1x8x16xf32>
    "tpu.trace_stop"() : () -> ()
    %cst_42 = arith.constant dense<0xFF800000> : vector<1x8xf32>
    %91 = vector.multi_reduction <maximumf>, %90, %cst_42 [2] : vector<1x8x16xf32> to vector<1x8xf32>
    %92 = vector.shape_cast %91 : vector<1x8xf32> to vector<1x8x1xf32>
    %93 = vector.broadcast %92 : vector<1x8x1xf32> to vector<1x8x16xf32>
    %94 = arith.subf %90, %93 : vector<1x8x16xf32>
    %95 = math.exp %94 : vector<1x8x16xf32>
    %cst_43 = arith.constant dense<0.000000e+00> : vector<1x8xf32>
    %96 = vector.multi_reduction <add>, %95, %cst_43 [2] : vector<1x8x16xf32> to vector<1x8xf32>
    %97 = vector.shape_cast %96 : vector<1x8xf32> to vector<1x8x1xf32>
    %98 = tpu.reciprocal %97 : vector<1x8x1xf32> -> vector<1x8x1xf32>
    "tpu.trace_start"() <{level = 10 : i32, message = "bqk,bkd->bqd"}> : () -> ()
    %cst_44 = arith.constant dense<0.000000e+00> : vector<1x8x8xf32>
    %99 = tpu.matmul %95, %89, %cst_44 {dimension_numbers = #tpu.dot_dimension_numbers<[2], [1], [1], [2], [0, 0, 0, 1, 1, 2], [0], [0]>} : vector<1x8x16xf32>, vector<1x16x8xf32>, vector<1x8x8xf32> -> vector<1x8x8xf32>
    "tpu.trace_stop"() : () -> ()
    %100 = vector.broadcast %98 : vector<1x8x1xf32> to vector<1x8x8xf32>
    %101 = arith.mulf %99, %100 : vector<1x8x8xf32>
    %c0_45 = arith.constant 0 : index
    %c0_46 = arith.constant 0 : index
    %c24 = arith.constant 24 : index
    %102 = vector.load %arg12[%c0_45, %c0_46, %c24] : memref<1x8x32xf32, #tpu.memory_space<vmem>>, vector<1x8x8xf32>
    tpu.vector_store %arg12[%c0_45, %c0_46, %c24], %101 {strides = array<i32>} : memref<1x8x32xf32, #tpu.memory_space<vmem>>, vector<1x8x8xf32>,
    %c0_47 = arith.constant 0 : index
    %c0_48 = arith.constant 0 : index
    %c0_49 = arith.constant 0 : index
    %103 = vector.load %arg12[%c0_47, %c0_48, %c0_49] : memref<1x8x32xf32, #tpu.memory_space<vmem>>, vector<1x8x32xf32>
    %104 = vector.shape_cast %103 : vector<1x8x32xf32> to vector<8x32xf32>
    %c0_50 = arith.constant 0 : index
    %c0_51 = arith.constant 0 : index
    %105 = vector.load %arg10[%c0_50, %c0_51] : memref<1x32xf32, #tpu.memory_space<vmem>>, vector<1x32xf32>
    %106 = vector.broadcast %105 : vector<1x32xf32> to vector<8x32xf32>
    %107 = arith.addf %0, %106 : vector<8x32xf32>
    %c0_52 = arith.constant 0 : index
    %c0_53 = arith.constant 0 : index
    %108 = vector.load %arg9[%c0_52, %c0_53] : memref<32x32xf32, #tpu.memory_space<vmem>>, vector<32x32xf32>
    %cst_54 = arith.constant dense<0.000000e+00> : vector<8x32xf32>
    %109 = tpu.matmul %104, %108, %cst_54 {dimension_numbers = #tpu.dot_dimension_numbers<[1], [0], [0], [1], [0, 0, 1, 1], [], []>} : vector<8x32xf32>, vector<32x32xf32>, vector<8x32xf32> -> vector<8x32xf32>
    %110 = arith.addf %107, %109 : vector<8x32xf32>
    %c0_55 = arith.constant 0 : index
    %c0_56 = arith.constant 0 : index
    %111 = vector.load %arg11[%c0_55, %c0_56] : memref<8x32xf32, #tpu.memory_space<vmem>>, vector<8x32xf32>
    tpu.vector_store %arg11[%c0_55, %c0_56], %110 {strides = array<i32>} : memref<8x32xf32, #tpu.memory_space<vmem>>, vector<8x32xf32>,
    return
  }
  func.func @transform_0(%arg0: i32) -> (i32, i32) {
    %c0_i32 = arith.constant 0 : i32
    %c0_i32_0 = arith.constant 0 : i32
    return %arg0, %c0_i32 : i32, i32
  }
  func.func @transform_1(%arg0: i32) -> (i32, i32) {
    %c0_i32 = arith.constant 0 : i32
    %c0_i32_0 = arith.constant 0 : i32
    return %arg0, %c0_i32 : i32, i32
  }
  func.func @transform_2(%arg0: i32) -> (i32, i32) {
    %c0_i32 = arith.constant 0 : i32
    %c0_i32_0 = arith.constant 0 : i32
    %c0_i32_1 = arith.constant 0 : i32
    return %c0_i32, %c0_i32_0 : i32, i32
  }
  func.func @transform_3(%arg0: i32) -> (i32, i32) {
    %c0_i32 = arith.constant 0 : i32
    %c0_i32_0 = arith.constant 0 : i32
    %c0_i32_1 = arith.constant 0 : i32
    return %c0_i32, %c0_i32_0 : i32, i32
  }
  func.func @transform_4(%arg0: i32) -> (i32, i32) {
    %c0_i32 = arith.constant 0 : i32
    %c0_i32_0 = arith.constant 0 : i32
    %c0_i32_1 = arith.constant 0 : i32
    return %c0_i32, %c0_i32_0 : i32, i32
  }
  func.func @transform_5(%arg0: i32) -> (i32, i32) {
    %c0_i32 = arith.constant 0 : i32
    %c0_i32_0 = arith.constant 0 : i32
    %c0_i32_1 = arith.constant 0 : i32
    return %c0_i32, %c0_i32_0 : i32, i32
  }
  func.func @transform_6(%arg0: i32) -> (i32, i32) {
    %c0_i32 = arith.constant 0 : i32
    %c0_i32_0 = arith.constant 0 : i32
    %c0_i32_1 = arith.constant 0 : i32
    return %c0_i32, %c0_i32_0 : i32, i32
  }
  func.func @transform_7(%arg0: i32) -> (i32, i32) {
    %c0_i32 = arith.constant 0 : i32
    %c0_i32_0 = arith.constant 0 : i32
    %c0_i32_1 = arith.constant 0 : i32
    return %c0_i32, %c0_i32_0 : i32, i32
  }
  func.func @transform_8(%arg0: i32) -> (i32, i32) {
    %c0_i32 = arith.constant 0 : i32
    %c0_i32_0 = arith.constant 0 : i32
    %c0_i32_1 = arith.constant 0 : i32
    return %c0_i32, %c0_i32_0 : i32, i32
  }
  func.func @transform_9(%arg0: i32) -> (i32, i32) {
    %c0_i32 = arith.constant 0 : i32
    %c0_i32_0 = arith.constant 0 : i32
    %c0_i32_1 = arith.constant 0 : i32
    return %c0_i32, %c0_i32_0 : i32, i32
  }
  func.func @transform_10(%arg0: i32) -> (i32, i32) {
    %c0_i32 = arith.constant 0 : i32
    %c0_i32_0 = arith.constant 0 : i32
    return %arg0, %c0_i32 : i32, i32
  }
}

</mosaic_0001>

<llo_original>
// kernel: tpu_custom_call.1
$region0: #{tpu_custom_call.1}
  #allocation0 [shape = 'u32[]', space=smem, size = 0x4, offset = 0x4, fixed_abs, tag = 'smem constant byte address 0x4 - core index']
  #allocation1 [shape = 'u32[144,128]{1,0:T(1,128)}', space=vmem, size = 0x12000, scoped, tag = 'internal scratch']
  #allocation2 [shape = 'f32[1,8,32]{2,1,0:T(8,128)}', space=vmem, size = 0x1000, scoped, tag = 'scratch operand']
  %s0 = inlined_call_operand.hbm [shape: f32[16,32], index: 0, kind: input, shape index: {}]
  %s1 = inlined_call_operand.hbm [shape: f32[32,32], index: 1, kind: input, shape index: {}]
  %s2 = inlined_call_operand.vmem [shape: f32[1,32], index: 2, kind: input, shape index: {}]
  %s3 = inlined_call_operand.vmem [shape: f32[1,32], index: 3, kind: input, shape index: {}]
  %s4 = inlined_call_operand.hbm [shape: f32[32,32], index: 4, kind: input, shape index: {}]
  %s5 = inlined_call_operand.vmem [shape: f32[1,32], index: 5, kind: input, shape index: {}]
  %s6 = inlined_call_operand.hbm [shape: f32[32,64], index: 6, kind: input, shape index: {}]
  %s7 = inlined_call_operand.vmem [shape: f32[1,64], index: 7, kind: input, shape index: {}]
  %s8 = inlined_call_operand.hbm [shape: f32[32,32], index: 8, kind: input, shape index: {}]
  %s9 = inlined_call_operand.vmem [shape: f32[1,32], index: 9, kind: input, shape index: {}]
  %s10 = inlined_call_operand.hbm [shape: f32[16,32], index: 10, kind: output, shape index: {}]
  %s11 = sld [smem:[#allocation0]]
  $region93: #{tpu_custom_call.1} parent=0
    _
  %s13 = ssub.s32 1, %s11
  %s14 = scalar_select 0, %s13, %s11
  $region1: #{tpu_custom_call.1} parent=0
    #allocation3 [shape = 'u8[8192]{0}', space=vmem, size = 0x2000, scoped, tag = 'input window, operand 0']
    #allocation4 [shape = 's32[2]{0}', space=sflag, size = 0x8, scoped, tag = 'scoped memory for tpu_custom_call.1']
    #allocation5 [shape = 's32[2]{0}', space=sflag, size = 0x8, scoped, tag = 'scoped memory for tpu_custom_call.1']
    #allocation6 [shape = 'u8[16384]{0}', space=vmem, size = 0x4000, scoped, tag = 'input window, operand 1']
    #allocation7 [shape = 's32[2]{0}', space=sflag, size = 0x8, scoped, tag = 'scoped memory for tpu_custom_call.1']
    #allocation8 [shape = 'u8[16384]{0}', space=vmem, size = 0x4000, scoped, tag = 'input window, operand 4, single buffered']
    #allocation9 [shape = 'u8[16384]{0}', space=vmem, size = 0x4000, scoped, tag = 'input window, operand 6, single buffered']
    #allocation10 [shape = 's32[1]{0}', space=sflag, size = 0x4, scoped, tag = 'scoped memory for tpu_custom_call.1']
    #allocation11 [shape = 'u8[16384]{0}', space=vmem, size = 0x4000, scoped, tag = 'input window, operand 8, single buffered']
    #allocation12 [shape = 'u8[8192]{0}', space=vmem, size = 0x2000, scoped, tag = 'output window, operand 0']
    %15 = vsyncpa [#allocation4], 0
    %s16 = scalar_lea.sflag [#allocation4], 1
    %17 = vsyncpa %s16, 0
    %18 = vsyncpa [#allocation7], 0
    %s19 = scalar_lea.sflag [#allocation7], 1
    %20 = vsyncpa %s19, 0
    %21 = vsyncpa [#allocation10], 0
    %22 = vsyncpa [#allocation5], 0
    %s23 = scalar_lea.sflag [#allocation5], 1
    %24 = vsyncpa %s23, 0
    loop: start=0, step=1, limit=4
    $region2: #{tpu_custom_call.1} parent=1 // loop_pre_header
      _
    $region3: #{tpu_custom_call.1} parent=1 // loop_header
      %s26 = sphi 0, %s30
      %p27 = scmp.ge.s32.totalorder %s26, 4
      %s36 = sphi 0, %s38
      %s39 = sphi 0, %s36
      %s40 = sphi 0, %s39
      %s56 = sphi 0, %s40
      %s62 = sphi 0, %s64
      %s65 = sphi 0, %s62
      %s66 = sphi 0, %s65
      %s82 = sphi 0, %s66
      %s86 = sphi 0, %s86
      %s88 = sphi 0, %s86
      %s89 = sphi 0, %s88
      %s103 = sphi 0, %s89
      %s107 = sphi 0, %s107
      %s109 = sphi 0, %s107
      %s110 = sphi 0, %s109
      %s124 = sphi 0, %s110
      %s128 = sphi 0, %s128
      %s130 = sphi 0, %s128
      %s131 = sphi 0, %s130
      %s145 = sphi 0, %s131
      %s149 = sphi 0, %s149
      %s151 = sphi 0, %s149
      %s152 = sphi 0, %s151
      %s166 = sphi 0, %s152
      %s170 = sphi 0, %s170
      %s172 = sphi 0, %s170
      %s173 = sphi 0, %s172
      %s187 = sphi 0, %s173
      %s191 = sphi 0, %s191
      %s193 = sphi 0, %s191
      %s194 = sphi 0, %s193
      %s208 = sphi 0, %s194
      %s212 = sphi 0, %s212
      %s214 = sphi 0, %s212
      %s215 = sphi 0, %s214
      %s229 = sphi 0, %s215
      %s233 = sphi 0, %s233
      %s235 = sphi 0, %s233
      %s236 = sphi 0, %s235
      %s250 = sphi 0, %s236
      %s256 = sphi 0, %s258
      %s259 = sphi 0, %s256
      %s260 = sphi 0, %s259
      %s276 = sphi 0, %s260
    $region4: #{tpu_custom_call.1} parent=1 // loop_header_branch
      %29 = sbr.rel (%p27) target = $region8
    $region5: #{tpu_custom_call.1} parent=1 // loop_body
      %s31 = ssub.s32 %s26, 1
      %s32 = ssub.s32 %s26, 2
      %s33 = sadd.s32 %s26, 1
      %s34 = ssub.s32 %s26, %s33
      %p35 = scmp.eq.s32.totalorder %s34, 0
      %s37 = sadd.s32 %s36, 1
      %s38 = scalar_select %p35, %s36, %s37
      %p41 = pneg %p35
      %p42 = scmp.eq.s32.totalorder %s26, 1
      %p43 = por %p41, %p42
      %p44 = scmp.ne.s32.totalorder %s36, %s39
      %p45 = scmp.eq.s32.totalorder %s26, 0
      %p46 = por %p44, %p45
      %p47 = scmp.ne.s32.totalorder %s36, %s39
      %p48 = scmp.eq.s32.totalorder %s31, 1
      %p49 = por %p47, %p48
      %p50 = scmp.ne.s32.totalorder %s39, %s40
      %p51 = scmp.eq.s32.totalorder %s31, 0
      %p52 = por %p50, %p51
      %p53 = scmp.ne.s32.totalorder %s39, %s40
      %p54 = scmp.eq.s32.totalorder %s32, 1
      %p55 = por %p53, %p54
      %p57 = scmp.ne.s32.totalorder %s40, %s56
      %p58 = scmp.eq.s32.totalorder %s32, 0
      %p59 = por %p57, %p58
      %s60 = ssub.s32 %s26, %s33
      %p61 = scmp.eq.s32.totalorder %s60, 0
      %s63 = sadd.s32 %s62, 1
      %s64 = scalar_select %p61, %s62, %s63
      %p67 = pneg %p61
      %p68 = scmp.eq.s32.totalorder %s26, 1
      %p69 = por %p67, %p68
      %p70 = scmp.ne.s32.totalorder %s62, %s65
      %p71 = scmp.eq.s32.totalorder %s26, 0
      %p72 = por %p70, %p71
      %p73 = scmp.ne.s32.totalorder %s62, %s65
      %p74 = scmp.eq.s32.totalorder %s31, 1
      %p75 = por %p73, %p74
      %p76 = scmp.ne.s32.totalorder %s65, %s66
      %p77 = scmp.eq.s32.totalorder %s31, 0
      %p78 = por %p76, %p77
      %p79 = scmp.ne.s32.totalorder %s65, %s66
      %p80 = scmp.eq.s32.totalorder %s32, 1
      %p81 = por %p79, %p80
      %p83 = scmp.ne.s32.totalorder %s66, %s82
      %p84 = scmp.eq.s32.totalorder %s32, 0
      %p85 = por %p83, %p84
      %s87 = sadd.s32 %s86, 1
      %p90 = scmp.eq.s32.totalorder %s26, 1
      %p91 = scmp.ne.s32.totalorder %s86, %s88
      %p92 = scmp.eq.s32.totalorder %s26, 0
      %p93 = por %p91, %p92
      %p94 = scmp.ne.s32.totalorder %s86, %s88
      %p95 = scmp.eq.s32.totalorder %s31, 1
      %p96 = por %p94, %p95
      %p97 = scmp.ne.s32.totalorder %s88, %s89
      %p98 = scmp.eq.s32.totalorder %s31, 0
      %p99 = por %p97, %p98
      %p100 = scmp.ne.s32.totalorder %s88, %s89
      %p101 = scmp.eq.s32.totalorder %s32, 1
      %p102 = por %p100, %p101
      %p104 = scmp.ne.s32.totalorder %s89, %s103
      %p105 = scmp.eq.s32.totalorder %s32, 0
      %p106 = por %p104, %p105
      %s108 = sadd.s32 %s107, 1
      %p111 = scmp.eq.s32.totalorder %s26, 1
      %p112 = scmp.ne.s32.totalorder %s107, %s109
      %p113 = scmp.eq.s32.totalorder %s26, 0
      %p114 = por %p112, %p113
      %p115 = scmp.ne.s32.totalorder %s107, %s109
      %p116 = scmp.eq.s32.totalorder %s31, 1
      %p117 = por %p115, %p116
      %p118 = scmp.ne.s32.totalorder %s109, %s110
      %p119 = scmp.eq.s32.totalorder %s31, 0
      %p120 = por %p118, %p119
      %p121 = scmp.ne.s32.totalorder %s109, %s110
      %p122 = scmp.eq.s32.totalorder %s32, 1
      %p123 = por %p121, %p122
      %p125 = scmp.ne.s32.totalorder %s110, %s124
      %p126 = scmp.eq.s32.totalorder %s32, 0
      %p127 = por %p125, %p126
      %s129 = sadd.s32 %s128, 1
      %p132 = scmp.eq.s32.totalorder %s26, 1
      %p133 = scmp.ne.s32.totalorder %s128, %s130
      %p134 = scmp.eq.s32.totalorder %s26, 0
      %p135 = por %p133, %p134
      %p136 = scmp.ne.s32.totalorder %s128, %s130
      %p137 = scmp.eq.s32.totalorder %s31, 1
      %p138 = por %p136, %p137
      %p139 = scmp.ne.s32.totalorder %s130, %s131
      %p140 = scmp.eq.s32.totalorder %s31, 0
      %p141 = por %p139, %p140
      %p142 = scmp.ne.s32.totalorder %s130, %s131
      %p143 = scmp.eq.s32.totalorder %s32, 1
      %p144 = por %p142, %p143
      %p146 = scmp.ne.s32.totalorder %s131, %s145
      %p147 = scmp.eq.s32.totalorder %s32, 0
      %p148 = por %p146, %p147
      %s150 = sadd.s32 %s149, 1
      %p153 = scmp.eq.s32.totalorder %s26, 1
      %p154 = scmp.ne.s32.totalorder %s149, %s151
      %p155 = scmp.eq.s32.totalorder %s26, 0
      %p156 = por %p154, %p155
      %p157 = scmp.ne.s32.totalorder %s149, %s151
      %p158 = scmp.eq.s32.totalorder %s31, 1
      %p159 = por %p157, %p158
      %p160 = scmp.ne.s32.totalorder %s151, %s152
      %p161 = scmp.eq.s32.totalorder %s31, 0
      %p162 = por %p160, %p161
      %p163 = scmp.ne.s32.totalorder %s151, %s152
      %p164 = scmp.eq.s32.totalorder %s32, 1
      %p165 = por %p163, %p164
      %p167 = scmp.ne.s32.totalorder %s152, %s166
      %p168 = scmp.eq.s32.totalorder %s32, 0
      %p169 = por %p167, %p168
      %s171 = sadd.s32 %s170, 1
      %p174 = scmp.eq.s32.totalorder %s26, 1
      %p175 = scmp.ne.s32.totalorder %s170, %s172
      %p176 = scmp.eq.s32.totalorder %s26, 0
      %p177 = por %p175, %p176
      %p178 = scmp.ne.s32.totalorder %s170, %s172
      %p179 = scmp.eq.s32.totalorder %s31, 1
      %p180 = por %p178, %p179
      %p181 = scmp.ne.s32.totalorder %s172, %s173
      %p182 = scmp.eq.s32.totalorder %s31, 0
      %p183 = por %p181, %p182
      %p184 = scmp.ne.s32.totalorder %s172, %s173
      %p185 = scmp.eq.s32.totalorder %s32, 1
      %p186 = por %p184, %p185
      %p188 = scmp.ne.s32.totalorder %s173, %s187
      %p189 = scmp.eq.s32.totalorder %s32, 0
      %p190 = por %p188, %p189
      %s192 = sadd.s32 %s191, 1
      %p195 = scmp.eq.s32.totalorder %s26, 1
      %p196 = scmp.ne.s32.totalorder %s191, %s193
      %p197 = scmp.eq.s32.totalorder %s26, 0
      %p198 = por %p196, %p197
      %p199 = scmp.ne.s32.totalorder %s191, %s193
      %p200 = scmp.eq.s32.totalorder %s31, 1
      %p201 = por %p199, %p200
      %p202 = scmp.ne.s32.totalorder %s193, %s194
      %p203 = scmp.eq.s32.totalorder %s31, 0
      %p204 = por %p202, %p203
      %p205 = scmp.ne.s32.totalorder %s193, %s194
      %p206 = scmp.eq.s32.totalorder %s32, 1
      %p207 = por %p205, %p206
      %p209 = scmp.ne.s32.totalorder %s194, %s208
      %p210 = scmp.eq.s32.totalorder %s32, 0
      %p211 = por %p209, %p210
      %s213 = sadd.s32 %s212, 1
      %p216 = scmp.eq.s32.totalorder %s26, 1
      %p217 = scmp.ne.s32.totalorder %s212, %s214
      %p218 = scmp.eq.s32.totalorder %s26, 0
      %p219 = por %p217, %p218
      %p220 = scmp.ne.s32.totalorder %s212, %s214
      %p221 = scmp.eq.s32.totalorder %s31, 1
      %p222 = por %p220, %p221
      %p223 = scmp.ne.s32.totalorder %s214, %s215
      %p224 = scmp.eq.s32.totalorder %s31, 0
      %p225 = por %p223, %p224
      %p226 = scmp.ne.s32.totalorder %s214, %s215
      %p227 = scmp.eq.s32.totalorder %s32, 1
      %p228 = por %p226, %p227
      %p230 = scmp.ne.s32.totalorder %s215, %s229
      %p231 = scmp.eq.s32.totalorder %s32, 0
      %p232 = por %p230, %p231
      %s234 = sadd.s32 %s233, 1
      %p237 = scmp.eq.s32.totalorder %s26, 1
      %p238 = scmp.ne.s32.totalorder %s233, %s235
      %p239 = scmp.eq.s32.totalorder %s26, 0
      %p240 = por %p238, %p239
      %p241 = scmp.ne.s32.totalorder %s233, %s235
      %p242 = scmp.eq.s32.totalorder %s31, 1
      %p243 = por %p241, %p242
      %p244 = scmp.ne.s32.totalorder %s235, %s236
      %p245 = scmp.eq.s32.totalorder %s31, 0
      %p246 = por %p244, %p245
      %p247 = scmp.ne.s32.totalorder %s235, %s236
      %p248 = scmp.eq.s32.totalorder %s32, 1
      %p249 = por %p247, %p248
      %p251 = scmp.ne.s32.totalorder %s236, %s250
      %p252 = scmp.eq.s32.totalorder %s32, 0
      %p253 = por %p251, %p252
      %s254 = ssub.s32 %s26, %s33
      %p255 = scmp.eq.s32.totalorder %s254, 0
      %s257 = sadd.s32 %s256, 1
      %s258 = scalar_select %p255, %s256, %s257
      %p261 = pneg %p255
      %p262 = scmp.eq.s32.totalorder %s26, 1
      %p263 = por %p261, %p262
      %p264 = scmp.ne.s32.totalorder %s256, %s259
      %p265 = scmp.eq.s32.totalorder %s26, 0
      %p266 = por %p264, %p265
      %p267 = scmp.ne.s32.totalorder %s256, %s259
      %p268 = scmp.eq.s32.totalorder %s31, 1
      %p269 = por %p267, %p268
      %p270 = scmp.ne.s32.totalorder %s259, %s260
      %p271 = scmp.eq.s32.totalorder %s31, 0
      %p272 = por %p270, %p271
      %p273 = scmp.ne.s32.totalorder %s259, %s260
      %p274 = scmp.eq.s32.totalorder %s32, 1
      %p275 = por %p273, %p274
      %p277 = scmp.ne.s32.totalorder %s260, %s276
      %p278 = scmp.eq.s32.totalorder %s32, 0
      %p279 = por %p277, %p278
      %p280 = scmp.le.s32.totalorder 1, %s26
      %p281 = scmp.lt.s32.totalorder %s26, 3
      %p282 = pnand %p280, %p281
      %p283 = pneg %p282
      // Predicated region
      $region9: #{tpu_custom_call.1} parent=5 // pred_check
        _
      $region10: #{tpu_custom_call.1} parent=5 // pred_check_branch
        %285 = sbr.rel (%p282) target = $region12
      $region11: #{tpu_custom_call.1} parent=5 // pred_region
        %s286 = ssub.s32 %s26, 1
        // Predicated region
        $region13: #{tpu_custom_call.1} parent=11 // pred_check
          %p287 = pneg %p99
        $region14: #{tpu_custom_call.1} parent=11 // pred_check_branch
          %289 = sbr.rel (%p287) target = $region16
        $region15: #{tpu_custom_call.1} parent=11 // pred_region
          _
        $region16: #{tpu_custom_call.1} parent=11 // pred_fallthru
          _
        // Predicated region
        $region17: #{tpu_custom_call.1} parent=11 // pred_check
          %p290 = pneg %p120
        $region18: #{tpu_custom_call.1} parent=11 // pred_check_branch
          %292 = sbr.rel (%p290) target = $region20
        $region19: #{tpu_custom_call.1} parent=11 // pred_region
          _
        $region20: #{tpu_custom_call.1} parent=11 // pred_fallthru
          _
        // Predicated region
        $region21: #{tpu_custom_call.1} parent=11 // pred_check
          %p293 = pneg %p141
        $region22: #{tpu_custom_call.1} parent=11 // pred_check_branch
          %295 = sbr.rel (%p293) target = $region24
        $region23: #{tpu_custom_call.1} parent=11 // pred_region
          %s297 = ssub.s32 512, 512
          %298 = vsyncadd [#allocation7], %s297
          %s299 = sshll.u32 [#allocation8], 4
          %s300 = int_to_ptr.vmem [resolvable:$true] %s299
          %305 = dma.hbm_to_vmem [thread:$0]  %s4, 512, %s300, [#allocation7], 128, 128, 8
        $region24: #{tpu_custom_call.1} parent=11 // pred_fallthru
          _
        // Predicated region
        $region25: #{tpu_custom_call.1} parent=11 // pred_check
          %p306 = pneg %p162
        $region26: #{tpu_custom_call.1} parent=11 // pred_check_branch
          %308 = sbr.rel (%p306) target = $region28
        $region27: #{tpu_custom_call.1} parent=11 // pred_region
          _
        $region28: #{tpu_custom_call.1} parent=11 // pred_fallthru
          _
        // Predicated region
        $region29: #{tpu_custom_call.1} parent=11 // pred_check
          %p309 = pneg %p183
        $region30: #{tpu_custom_call.1} parent=11 // pred_check_branch
          %311 = sbr.rel (%p309) target = $region32
        $region31: #{tpu_custom_call.1} parent=11 // pred_region
          %s313 = ssub.s32 512, 512
          %314 = vsyncadd [#allocation10], %s313
          %s315 = sshll.u32 [#allocation9], 4
          %s316 = int_to_ptr.vmem [resolvable:$true] %s315
          %321 = dma.hbm_to_vmem [thread:$0]  %s6, 512, %s316, [#allocation10], 128, 128, 8
        $region32: #{tpu_custom_call.1} parent=11 // pred_fallthru
          _
        // Predicated region
        $region33: #{tpu_custom_call.1} parent=11 // pred_check
          %p322 = pneg %p204
        $region34: #{tpu_custom_call.1} parent=11 // pred_check_branch
          %324 = sbr.rel (%p322) target = $region36
        $region35: #{tpu_custom_call.1} parent=11 // pred_region
          _
        $region36: #{tpu_custom_call.1} parent=11 // pred_fallthru
          _
        // Predicated region
        $region37: #{tpu_custom_call.1} parent=11 // pred_check
          %p325 = pneg %p225
        $region38: #{tpu_custom_call.1} parent=11 // pred_check_branch
          %327 = sbr.rel (%p325) target = $region40
        $region39: #{tpu_custom_call.1} parent=11 // pred_region
          %s329 = ssub.s32 512, 512
          %330 = vsyncadd [#allocation10], %s329
          %s331 = sshll.u32 [#allocation11], 4
          %s332 = int_to_ptr.vmem [resolvable:$true] %s331
          %337 = dma.hbm_to_vmem [thread:$0]  %s8, 512, %s332, [#allocation10], 128, 128, 8
        $region40: #{tpu_custom_call.1} parent=11 // pred_fallthru
          _
        // Predicated region
        $region41: #{tpu_custom_call.1} parent=11 // pred_check
          %p338 = pneg %p246
        $region42: #{tpu_custom_call.1} parent=11 // pred_check_branch
          %340 = sbr.rel (%p338) target = $region44
        $region43: #{tpu_custom_call.1} parent=11 // pred_region
          _
        $region44: #{tpu_custom_call.1} parent=11 // pred_fallthru
          _
      $region12: #{tpu_custom_call.1} parent=5 // pred_fallthru
        _
      %p341 = scmp.lt.s32.totalorder %s26, 2
      // Predicated region
      $region45: #{tpu_custom_call.1} parent=5 // pred_check
        %p342 = pneg %p341
      $region46: #{tpu_custom_call.1} parent=5 // pred_check_branch
        %344 = sbr.rel (%p342) target = $region48
      $region47: #{tpu_custom_call.1} parent=5 // pred_region
        // Predicated region
        $region49: #{tpu_custom_call.1} parent=47 // pred_check
          %p345 = pneg %p46
        $region50: #{tpu_custom_call.1} parent=47 // pred_check_branch
          %347 = sbr.rel (%p345) target = $region52
        $region51: #{tpu_custom_call.1} parent=47 // pred_region
          %s348 = sand.u32 %s36, 1
          %s349 = scalar_lea.sflag [#allocation4], %s348
          %s350 = sand.u32 %s36, 1
          %s351 = smul.addr %s350, 8
          %s352 = scalar_lea.vmem [#allocation3], %s351
          %s354 = ssub.s32 128, 128
          %355 = vsyncadd %s349, %s354
          %s356 = smul.addr %s26, 128
          %s357 = scalar_lea.hbm %s0, %s356
          %s359 = sshll.u32 %s352, 4
          %s360 = int_to_ptr.vmem [resolvable:$true] %s359
          %362 = dma.hbm_to_vmem [thread:$0]  %s357, 128, %s360, %s349
        $region52: #{tpu_custom_call.1} parent=47 // pred_fallthru
          _
        // Predicated region
        $region53: #{tpu_custom_call.1} parent=47 // pred_check
          %p363 = pneg %p72
        $region54: #{tpu_custom_call.1} parent=47 // pred_check_branch
          %365 = sbr.rel (%p363) target = $region56
        $region55: #{tpu_custom_call.1} parent=47 // pred_region
          %s366 = sand.u32 %s26, 1
          %s367 = scalar_lea.sflag [#allocation7], %s366
          %s368 = sand.u32 %s62, 1
          %s369 = smul.addr %s368, 16
          %s370 = scalar_lea.vmem [#allocation6], %s369
          %s371 = smul.u32 2, %s26
          %s373 = ssub.s32 256, 256
          %374 = vsyncadd %s367, %s373
          %s375 = smul.addr %s371, 128
          %s376 = scalar_lea.hbm %s1, %s375
          %s377 = sshll.u32 %s370, 4
          %s378 = int_to_ptr.vmem [resolvable:$true] %s377
          %383 = dma.hbm_to_vmem [thread:$0]  %s376, 256, %s378, %s367, 128, 128, 8
        $region56: #{tpu_custom_call.1} parent=47 // pred_fallthru
          _
      $region48: #{tpu_custom_call.1} parent=5 // pred_fallthru
        _
      %p384 = scmp.le.s32.totalorder 1, %s26
      %p385 = scmp.lt.s32.totalorder %s26, 3
      %p386 = pnand %p384, %p385
      %p387 = pneg %p386
      // Predicated region
      $region57: #{tpu_custom_call.1} parent=5 // pred_check
        _
      $region58: #{tpu_custom_call.1} parent=5 // pred_check_branch
        %389 = sbr.rel (%p386) target = $region60
      $region59: #{tpu_custom_call.1} parent=5 // pred_region
        %s390 = ssub.s32 %s26, 1
        %s391 = sand.u32 %s39, 1
        %s392 = scalar_lea.sflag [#allocation4], %s391
        %s393 = sand.u32 %s39, 1
        %s394 = smul.addr %s393, 8
        %s395 = scalar_lea.vmem [#allocation3], %s394
        // Predicated region
        $region61: #{tpu_custom_call.1} parent=59 // pred_check
          %p396 = pneg %p52
        $region62: #{tpu_custom_call.1} parent=59 // pred_check_branch
          %398 = sbr.rel (%p396) target = $region64
        $region63: #{tpu_custom_call.1} parent=59 // pred_region
          %399 = dma.done %s392, 128
        $region64: #{tpu_custom_call.1} parent=59 // pred_fallthru
          _
        %s400 = sand.u32 %s31, 1
        %s401 = scalar_lea.sflag [#allocation7], %s400
        %s402 = sand.u32 %s65, 1
        %s403 = smul.addr %s402, 16
        %s404 = scalar_lea.vmem [#allocation6], %s403
        // Predicated region
        $region65: #{tpu_custom_call.1} parent=59 // pred_check
          %p405 = pneg %p78
        $region66: #{tpu_custom_call.1} parent=59 // pred_check_branch
          %407 = sbr.rel (%p405) target = $region68
        $region67: #{tpu_custom_call.1} parent=59 // pred_region
          %408 = dma.done %s401, 256
        $region68: #{tpu_custom_call.1} parent=59 // pred_fallthru
          _
        // Predicated region
        $region69: #{tpu_custom_call.1} parent=59 // pred_check
          %p409 = pneg %p141
        $region70: #{tpu_custom_call.1} parent=59 // pred_check_branch
          %411 = sbr.rel (%p409) target = $region72
        $region71: #{tpu_custom_call.1} parent=59 // pred_region
          %412 = dma.done [#allocation7], 512
        $region72: #{tpu_custom_call.1} parent=59 // pred_fallthru
          _
        // Predicated region
        $region73: #{tpu_custom_call.1} parent=59 // pred_check
          %p413 = pneg %p183
        $region74: #{tpu_custom_call.1} parent=59 // pred_check_branch
          %415 = sbr.rel (%p413) target = $region76
        $region75: #{tpu_custom_call.1} parent=59 // pred_region
          %416 = dma.done [#allocation10], 512
        $region76: #{tpu_custom_call.1} parent=59 // pred_fallthru
          _
        // Predicated region
        $region77: #{tpu_custom_call.1} parent=59 // pred_check
          %p417 = pneg %p225
        $region78: #{tpu_custom_call.1} parent=59 // pred_check_branch
          %419 = sbr.rel (%p417) target = $region80
        $region79: #{tpu_custom_call.1} parent=59 // pred_region
          %420 = dma.done [#allocation10], 512
        $region80: #{tpu_custom_call.1} parent=59 // pred_fallthru
          _
        %s421 = sand.u32 %s39, 1
        %s422 = scalar_lea.sflag [#allocation4], %s421
        %s423 = sand.u32 %s39, 1
        %s424 = smul.addr %s423, 8
        %s425 = scalar_lea.vmem [#allocation3], %s424
        %p426 = pneg %p52
        %p427 = pneg %p49
        %s428 = sand.u32 %s31, 1
        %s429 = scalar_lea.sflag [#allocation7], %s428
        %s430 = sand.u32 %s65, 1
        %s431 = smul.addr %s430, 16
        %s432 = scalar_lea.vmem [#allocation6], %s431
        %p433 = pneg %p78
        %p434 = pneg %p75
        %p435 = pneg %p99
        %p436 = pneg %p96
        %p437 = pneg %p120
        %p438 = pneg %p117
        %p439 = pneg %p141
        %p440 = pneg %p138
        %p441 = pneg %p162
        %p442 = pneg %p159
        %p443 = pneg %p183
        %p444 = pneg %p180
        %p445 = pneg %p204
        %p446 = pneg %p201
        %p447 = pneg %p225
        %p448 = pneg %p222
        %p449 = pneg %p246
        %p450 = pneg %p243
        %p451 = pneg %p272
        %p452 = pneg %p269
        %s453 = sand.u32 %s259, 1
        %s454 = scalar_lea.sflag [#allocation5], %s453
        %s455 = sand.u32 %s259, 1
        %s456 = smul.addr %s455, 8
        %s457 = scalar_lea.vmem [#allocation12], %s456
        %s458 = smul.u32 2, %s31
        %v459 = vld [vmem:[%s395] sm:$0xff]
        %v460 = vld [vmem:[%s404] sm:$0xff]
        %v461 = vld [vmem:[%s404 + $0x8] sm:$0xff]
        %vm462 = vcmask 261120
        %v463 = vsel %vm462, %v459, 0.0
        %464 = vadd.xlane.f32.xlu0 %v463
        %v465 = vpop.xlane.xlu0 %464
        %v466 = vrcp.pop 32.0
        %v467 = vmul.f32 %v465, %v466
        %v468 = vsub.f32 %v459, %v467
        %v469 = vmul.f32 %v468, %v468
        %v470 = vsel %vm462, %v469, 0.0
        %471 = vadd.xlane.f32.xlu0 %v470
        %v472 = vpop.xlane.xlu0 %471
        %v473 = vmul.f32 %v472, 0.032258064
        %v474 = vrsqrt.pop %v473
        %v475 = vmul.f32 %v473, %v474
        %vm476 = vcmp.eq.f32.partialorder %v473, inf
        %v477 = vsel %vm476, %v473, %v475
        %vm478 = vcmp.eq.f32.partialorder %v473, 0.0
        %v479 = vand.u32 %v473, 2147483648
        %v480 = vsel %vm478, %v479, %v477
        %v481 = vadd.f32 %v480, 1e-06
        %v482 = vrcp.pop %v481
        %v483 = vld [vmem:[%s2] sm:$0x1]
        %v484 = vmul.f32 %v468, %v482
        %v486 = vlaneseq
        %v487 = vshrl.u32 %v486, 7
        %v488 = vsub.s32 0, %v487
        %v489 = vrot.slane %v483, %v488
        %v491 = vmul.f32 %v489, %v484
        %v492 = vld [vmem:[%s3] sm:$0x1]
        %v494 = vlaneseq
        %v495 = vshrl.u32 %v494, 7
        %v496 = vsub.s32 0, %v495
        %v497 = vrot.slane %v492, %v496
        %v499 = vadd.f32 %v491, %v497
        %v500 = vld [vmem:[#allocation8] sm:$0xff]
        %v501 = vld [vmem:[#allocation8 + $0x8] sm:$0xff]
        %v502 = vld [vmem:[#allocation8 + $0x10] sm:$0xff]
        %v503 = vld [vmem:[#allocation8 + $0x18] sm:$0xff]
        %v504 = vld [vmem:[%s5] sm:$0x1]
        %v506 = vlaneseq
        %v507 = vshrl.u32 %v506, 7
        %v508 = vsub.s32 0, %v507
        %v509 = vrot.slane %v504, %v508
        %v512 = vsel %vm462, %v499, 0
        %514 = vmatprep.subr.mxu0 0.0
        %515 = vmatpush1.msra.mxu0 0.0
        %516 = vmatprep.subr.mxu0 0.0
        %517 = vmatpush1.msra.mxu0 0.0
        %518 = vmatprep.subr.mxu0 0.0
        %519 = vmatpush1.msra.mxu0 0.0
        %520 = vmatprep.subr.mxu0 0.0
        %521 = vmatpush1.msra.mxu0 0.0
        %522 = vmatprep.subr.mxu0 0.0
        %523 = vmatpush1.msra.mxu0 0.0
        %524 = vmatprep.subr.mxu0 0.0
        %525 = vmatpush1.msra.mxu0 0.0
        %526 = vmatprep.subr.mxu0 0.0
        %527 = vmatpush1.msra.mxu0 0.0
        %528 = vmatprep.subr.mxu0 0.0
        %529 = vmatpush1.msra.mxu0 0.0
        %530 = vmatprep.subr.mxu0 0.0
        %531 = vmatpush1.msra.mxu0 0.0
        %532 = vmatprep.subr.mxu0 0.0
        %533 = vmatpush1.msra.mxu0 0.0
        %534 = vmatprep.subr.mxu0 0.0
        %535 = vmatpush1.msra.mxu0 0.0
        %536 = vmatprep.subr.mxu0 0.0
        %537 = vmatpush1.msra.mxu0 0.0
        %538 = vmatprep.subr.mxu0 0.0
        %539 = vmatpush1.msra.mxu0 %v503
        %540 = vmatprep.subr.mxu0 0.0
        %541 = vmatpush1.msra.mxu0 %v502
        %542 = vmatprep.subr.mxu0 0.0
        %543 = vmatpush1.msra.mxu0 %v501
        %544 = vmatprep.subr.mxu0 0.0
        %545 = vmatpush1.msra.mxu0 %v500
        %546 = vmatprep.subr.mxu0 0.0
        %547 = vmatpush2.msra.mxu0 0.0
        %548 = vmatprep.subr.mxu0 0.0
        %549 = vmatpush2.msra.mxu0 0.0
        %550 = vmatprep.subr.mxu0 0.0
        %551 = vmatpush2.msra.mxu0 0.0
        %552 = vmatprep.subr.mxu0 0.0
        %553 = vmatpush2.msra.mxu0 0.0
        %554 = vmatprep.subr.mxu0 0.0
        %555 = vmatpush2.msra.mxu0 0.0
        %556 = vmatprep.subr.mxu0 0.0
        %557 = vmatpush2.msra.mxu0 0.0
        %558 = vmatprep.subr.mxu0 0.0
        %559 = vmatpush2.msra.mxu0 0.0
        %560 = vmatprep.subr.mxu0 0.0
        %561 = vmatpush2.msra.mxu0 0.0
        %562 = vmatprep.subr.mxu0 0.0
        %563 = vmatpush2.msra.mxu0 0.0
        %564 = vmatprep.subr.mxu0 0.0
        %565 = vmatpush2.msra.mxu0 0.0
        %566 = vmatprep.subr.mxu0 0.0
        %567 = vmatpush2.msra.mxu0 0.0
        %568 = vmatprep.subr.mxu0 0.0
        %569 = vmatpush2.msra.mxu0 0.0
        %570 = vmatprep.subr.mxu0 0.0
        %571 = vmatpush2.msra.mxu0 0.0
        %572 = vmatprep.subr.mxu0 0.0
        %573 = vmatpush2.msra.mxu0 0.0
        %574 = vmatprep.subr.mxu0 0.0
        %575 = vmatpush2.msra.mxu0 0.0
        %576 = vmatprep.subr.mxu0 0.0
        %577 = vmatpush2.msra.mxu0 0.0
        %578 = vmatprep.mubr.f32.mxu0 0.0
        %579 = vmatmul.mubr.f32.gmra.mxu0 %v512
        %v580 = vpop.f32.mrf.mxu0
        %v581 = vadd.f32 %v509, %v580
        %v582 = vpop.f32.mrf.mxu0
        %583 = vdwg.mxu0
        %v584 = vmul.f32 %v581, 0.35355338
        %v585 = vld [vmem:[#allocation9] sm:$0xff]
        %v586 = vld [vmem:[#allocation9 + $0x8] sm:$0xff]
        %v587 = vld [vmem:[#allocation9 + $0x10] sm:$0xff]
        %v588 = vld [vmem:[#allocation9 + $0x18] sm:$0xff]
        %v589 = vld [vmem:[%s7] sm:$0x1]
        %v591 = vlaneseq
        %v592 = vshrl.u32 %v591, 7
        %v593 = vsub.s32 0, %v592
        %v594 = vrot.slane %v589, %v593
        %v597 = vsel %vm462, %v460, 0
        %v600 = vsel %vm462, %v461, 0
        %602 = vmatprep.subr.mxu0 0.0
        %603 = vmatpush1.msra.mxu0 0.0
        %604 = vmatprep.subr.mxu0 0.0
        %605 = vmatpush1.msra.mxu0 0.0
        %606 = vmatprep.subr.mxu0 0.0
        %607 = vmatpush1.msra.mxu0 0.0
        %608 = vmatprep.subr.mxu0 0.0
        %609 = vmatpush1.msra.mxu0 0.0
        %610 = vmatprep.subr.mxu0 0.0
        %611 = vmatpush1.msra.mxu0 0.0
        %612 = vmatprep.subr.mxu0 0.0
        %613 = vmatpush1.msra.mxu0 0.0
        %614 = vmatprep.subr.mxu0 0.0
        %615 = vmatpush1.msra.mxu0 0.0
        %616 = vmatprep.subr.mxu0 0.0
        %617 = vmatpush1.msra.mxu0 0.0
        %618 = vmatprep.subr.mxu0 0.0
        %619 = vmatpush1.msra.mxu0 0.0
        %620 = vmatprep.subr.mxu0 0.0
        %621 = vmatpush1.msra.mxu0 0.0
        %622 = vmatprep.subr.mxu0 0.0
        %623 = vmatpush1.msra.mxu0 0.0
        %624 = vmatprep.subr.mxu0 0.0
        %625 = vmatpush1.msra.mxu0 0.0
        %626 = vmatprep.subr.mxu0 0.0
        %627 = vmatpush1.msra.mxu0 %v588
        %628 = vmatprep.subr.mxu0 0.0
        %629 = vmatpush1.msra.mxu0 %v587
        %630 = vmatprep.subr.mxu0 0.0
        %631 = vmatpush1.msra.mxu0 %v586
        %632 = vmatprep.subr.mxu0 0.0
        %633 = vmatpush1.msra.mxu0 %v585
        %634 = vmatprep.subr.mxu0 0.0
        %635 = vmatpush2.msra.mxu0 0.0
        %636 = vmatprep.subr.mxu0 0.0
        %637 = vmatpush2.msra.mxu0 0.0
        %638 = vmatprep.subr.mxu0 0.0
        %639 = vmatpush2.msra.mxu0 0.0
        %640 = vmatprep.subr.mxu0 0.0
        %641 = vmatpush2.msra.mxu0 0.0
        %642 = vmatprep.subr.mxu0 0.0
        %643 = vmatpush2.msra.mxu0 0.0
        %644 = vmatprep.subr.mxu0 0.0
        %645 = vmatpush2.msra.mxu0 0.0
        %646 = vmatprep.subr.mxu0 0.0
        %647 = vmatpush2.msra.mxu0 0.0
        %648 = vmatprep.subr.mxu0 0.0
        %649 = vmatpush2.msra.mxu0 0.0
        %650 = vmatprep.subr.mxu0 0.0
        %651 = vmatpush2.msra.mxu0 0.0
        %652 = vmatprep.subr.mxu0 0.0
        %653 = vmatpush2.msra.mxu0 0.0
        %654 = vmatprep.subr.mxu0 0.0
        %655 = vmatpush2.msra.mxu0 0.0
        %656 = vmatprep.subr.mxu0 0.0
        %657 = vmatpush2.msra.mxu0 0.0
        %658 = vmatprep.subr.mxu0 0.0
        %659 = vmatpush2.msra.mxu0 0.0
        %660 = vmatprep.subr.mxu0 0.0
        %661 = vmatpush2.msra.mxu0 0.0
        %662 = vmatprep.subr.mxu0 0.0
        %663 = vmatpush2.msra.mxu0 0.0
        %664 = vmatprep.subr.mxu0 0.0
        %665 = vmatpush2.msra.mxu0 0.0
        %666 = vmatprep.mubr.f32.mxu0 0.0
        %667 = vmatmul.mubr.f32.gmra.mxu0 %v597
        %v668 = vpop.f32.mrf.mxu0
        %v669 = vadd.f32 %v594, %v668
        %v670 = vpop.f32.mrf.mxu0
        %671 = vmatprep.mubr.f32.mxu0 0.0
        %672 = vmatmul.mubr.f32.gmra.mxu0 %v600
        %v673 = vpop.f32.mrf.mxu0
        %v674 = vadd.f32 %v594, %v673
        %v675 = vpop.f32.mrf.mxu0
        %676 = vdwg.mxu0
        %vm677 = vcmask 64512
        %v679 = vsel %vm677, %v584, 0
        %v682 = vsel %vm677, %v669, 0
        %v685 = vsel %vm677, %v674, 0
        %687 = vmatprep.subr.mxu0 0.0
        %688 = vmatpush1.xpose.msra.mxu0 0.0
        %689 = vmatprep.subr.mxu0 0.0
        %690 = vmatpush1.xpose.msra.mxu0 0.0
        %691 = vmatprep.subr.mxu0 0.0
        %692 = vmatpush1.xpose.msra.mxu0 0.0
        %693 = vmatprep.subr.mxu0 0.0
        %694 = vmatpush1.xpose.msra.mxu0 0.0
        %695 = vmatprep.subr.mxu0 0.0
        %696 = vmatpush1.xpose.msra.mxu0 0.0
        %697 = vmatprep.subr.mxu0 0.0
        %698 = vmatpush1.xpose.msra.mxu0 0.0
        %699 = vmatprep.subr.mxu0 0.0
        %700 = vmatpush1.xpose.msra.mxu0 0.0
        %701 = vmatprep.subr.mxu0 0.0
        %702 = vmatpush1.xpose.msra.mxu0 0.0
        %703 = vmatprep.subr.mxu0 0.0
        %704 = vmatpush1.xpose.msra.mxu0 0.0
        %705 = vmatprep.subr.mxu0 0.0
        %706 = vmatpush1.xpose.msra.mxu0 0.0
        %707 = vmatprep.subr.mxu0 0.0
        %708 = vmatpush1.xpose.msra.mxu0 0.0
        %709 = vmatprep.subr.mxu0 0.0
        %710 = vmatpush1.xpose.msra.mxu0 0.0
        %711 = vmatprep.subr.mxu0 0.0
        %712 = vmatpush1.xpose.msra.mxu0 0.0
        %713 = vmatprep.subr.mxu0 0.0
        %714 = vmatpush1.xpose.msra.mxu0 0.0
        %715 = vmatprep.subr.mxu0 0.0
        %716 = vmatpush1.xpose.msra.mxu0 %v685
        %717 = vmatprep.subr.mxu0 0.0
        %718 = vmatpush1.xpose.msra.mxu0 %v682
        %719 = vmatprep.subr.mxu0 0.0
        %720 = vmatpush2.xpose.msra.mxu0 0.0
        %721 = vmatprep.subr.mxu0 0.0
        %722 = vmatpush2.xpose.msra.mxu0 0.0
        %723 = vmatprep.subr.mxu0 0.0
        %724 = vmatpush2.xpose.msra.mxu0 0.0
        %725 = vmatprep.subr.mxu0 0.0
        %726 = vmatpush2.xpose.msra.mxu0 0.0
        %727 = vmatprep.subr.mxu0 0.0
        %728 = vmatpush2.xpose.msra.mxu0 0.0
        %729 = vmatprep.subr.mxu0 0.0
        %730 = vmatpush2.xpose.msra.mxu0 0.0
        %731 = vmatprep.subr.mxu0 0.0
        %732 = vmatpush2.xpose.msra.mxu0 0.0
        %733 = vmatprep.subr.mxu0 0.0
        %734 = vmatpush2.xpose.msra.mxu0 0.0
        %735 = vmatprep.subr.mxu0 0.0
        %736 = vmatpush2.xpose.msra.mxu0 0.0
        %737 = vmatprep.subr.mxu0 0.0
        %738 = vmatpush2.xpose.msra.mxu0 0.0
        %739 = vmatprep.subr.mxu0 0.0
        %740 = vmatpush2.xpose.msra.mxu0 0.0
        %741 = vmatprep.subr.mxu0 0.0
        %742 = vmatpush2.xpose.msra.mxu0 0.0
        %743 = vmatprep.subr.mxu0 0.0
        %744 = vmatpush2.xpose.msra.mxu0 0.0
        %745 = vmatprep.subr.mxu0 0.0
        %746 = vmatpush2.xpose.msra.mxu0 0.0
        %747 = vmatprep.subr.mxu0 0.0
        %748 = vmatpush2.xpose.msra.mxu0 0.0
        %749 = vmatprep.subr.mxu0 0.0
        %750 = vmatpush2.xpose.msra.mxu0 0.0
        %751 = vmatprep.mubr.f32.mxu0 0.0
        %752 = vmatmul.mubr.f32.gmra.mxu0 %v679
        %v753 = vpop.f32.mrf.mxu0
        %v754 = vadd.f32 0.0, %v753
        %v755 = vpop.f32.mrf.mxu0
        %756 = vdwg.mxu0
        %vm757 = vcmask 130048
        %v758 = vsel %vm757, %v754, -inf
        %759 = vmax.xlane.f32.xlu0 %v758
        %v760 = vpop.xlane.xlu0 %759
        %v761 = vsub.f32 %v754, %v760
        %v762 = vmul.f32 %v761, 1.442695
        %v763 = vpow.pop %v762
        %v764 = vsel %vm757, %v763, 0.0
        %765 = vadd.xlane.f32.xlu0 %v764
        %v766 = vpop.xlane.xlu0 %765
        %v767 = vrcp.pop %v766
        %768 = vrot.lane.b32.xlu0 %v669, 96
        %v769 = vpop.permute.xlu0 %768
        %770 = vrot.lane.b32.xlu0 %v674, 96
        %v771 = vpop.permute.xlu0 %770
        %v775 = vsel %vm757, %v763, 0
        %777 = vmatprep.subr.mxu0 0.0
        %778 = vmatpush1.msra.mxu0 0.0
        %779 = vmatprep.subr.mxu0 0.0
        %780 = vmatpush1.msra.mxu0 0.0
        %781 = vmatprep.subr.mxu0 0.0
        %782 = vmatpush1.msra.mxu0 0.0
        %783 = vmatprep.subr.mxu0 0.0
        %784 = vmatpush1.msra.mxu0 0.0
        %785 = vmatprep.subr.mxu0 0.0
        %786 = vmatpush1.msra.mxu0 0.0
        %787 = vmatprep.subr.mxu0 0.0
        %788 = vmatpush1.msra.mxu0 0.0
        %789 = vmatprep.subr.mxu0 0.0
        %790 = vmatpush1.msra.mxu0 0.0
        %791 = vmatprep.subr.mxu0 0.0
        %792 = vmatpush1.msra.mxu0 0.0
        %793 = vmatprep.subr.mxu0 0.0
        %794 = vmatpush1.msra.mxu0 0.0
        %795 = vmatprep.subr.mxu0 0.0
        %796 = vmatpush1.msra.mxu0 0.0
        %797 = vmatprep.subr.mxu0 0.0
        %798 = vmatpush1.msra.mxu0 0.0
        %799 = vmatprep.subr.mxu0 0.0
        %800 = vmatpush1.msra.mxu0 0.0
        %801 = vmatprep.subr.mxu0 0.0
        %802 = vmatpush1.msra.mxu0 0.0
        %803 = vmatprep.subr.mxu0 0.0
        %804 = vmatpush1.msra.mxu0 0.0
        %805 = vmatprep.subr.mxu0 0.0
        %806 = vmatpush1.msra.mxu0 %v771
        %807 = vmatprep.subr.mxu0 0.0
        %808 = vmatpush1.msra.mxu0 %v769
        %809 = vmatprep.subr.mxu0 0.0
        %810 = vmatpush2.msra.mxu0 0.0
        %811 = vmatprep.subr.mxu0 0.0
        %812 = vmatpush2.msra.mxu0 0.0
        %813 = vmatprep.subr.mxu0 0.0
        %814 = vmatpush2.msra.mxu0 0.0
        %815 = vmatprep.subr.mxu0 0.0
        %816 = vmatpush2.msra.mxu0 0.0
        %817 = vmatprep.subr.mxu0 0.0
        %818 = vmatpush2.msra.mxu0 0.0
        %819 = vmatprep.subr.mxu0 0.0
        %820 = vmatpush2.msra.mxu0 0.0
        %821 = vmatprep.subr.mxu0 0.0
        %822 = vmatpush2.msra.mxu0 0.0
        %823 = vmatprep.subr.mxu0 0.0
        %824 = vmatpush2.msra.mxu0 0.0
        %825 = vmatprep.subr.mxu0 0.0
        %826 = vmatpush2.msra.mxu0 0.0
        %827 = vmatprep.subr.mxu0 0.0
        %828 = vmatpush2.msra.mxu0 0.0
        %829 = vmatprep.subr.mxu0 0.0
        %830 = vmatpush2.msra.mxu0 0.0
        %831 = vmatprep.subr.mxu0 0.0
        %832 = vmatpush2.msra.mxu0 0.0
        %833 = vmatprep.subr.mxu0 0.0
        %834 = vmatpush2.msra.mxu0 0.0
        %835 = vmatprep.subr.mxu0 0.0
        %836 = vmatpush2.msra.mxu0 0.0
        %837 = vmatprep.subr.mxu0 0.0
        %838 = vmatpush2.msra.mxu0 0.0
        %839 = vmatprep.subr.mxu0 0.0
        %840 = vmatpush2.msra.mxu0 0.0
        %841 = vmatprep.mubr.f32.mxu0 0.0
        %842 = vmatmul.mubr.f32.gmra.mxu0 %v775
        %v843 = vpop.f32.mrf.mxu0
        %v844 = vadd.f32 0.0, %v843
        %v845 = vpop.f32.mrf.mxu0
        %846 = vdwg.mxu0
        %v847 = vmul.f32 %v844, %v767
        %848 = vst.msk [vmem:[#allocation2] sm:$0xff] %vm677, %v847
        %849 = vrot.lane.b32.xlu0 %v584, 120
        %v850 = vpop.permute.xlu0 %849
        %851 = vrot.lane.b32.xlu0 %v669, 120
        %v852 = vpop.permute.xlu0 %851
        %853 = vrot.lane.b32.xlu0 %v674, 120
        %v854 = vpop.permute.xlu0 %853
        %v855 = vsel %vm677, %v850, 0
        %v857 = vsel %vm677, %v852, 0
        %v859 = vsel %vm677, %v854, 0
        %861 = vmatprep.subr.mxu0 0.0
        %862 = vmatpush1.xpose.msra.mxu0 0.0
        %863 = vmatprep.subr.mxu0 0.0
        %864 = vmatpush1.xpose.msra.mxu0 0.0
        %865 = vmatprep.subr.mxu0 0.0
        %866 = vmatpush1.xpose.msra.mxu0 0.0
        %867 = vmatprep.subr.mxu0 0.0
        %868 = vmatpush1.xpose.msra.mxu0 0.0
        %869 = vmatprep.subr.mxu0 0.0
        %870 = vmatpush1.xpose.msra.mxu0 0.0
        %871 = vmatprep.subr.mxu0 0.0
        %872 = vmatpush1.xpose.msra.mxu0 0.0
        %873 = vmatprep.subr.mxu0 0.0
        %874 = vmatpush1.xpose.msra.mxu0 0.0
        %875 = vmatprep.subr.mxu0 0.0
        %876 = vmatpush1.xpose.msra.mxu0 0.0
        %877 = vmatprep.subr.mxu0 0.0
        %878 = vmatpush1.xpose.msra.mxu0 0.0
        %879 = vmatprep.subr.mxu0 0.0
        %880 = vmatpush1.xpose.msra.mxu0 0.0
        %881 = vmatprep.subr.mxu0 0.0
        %882 = vmatpush1.xpose.msra.mxu0 0.0
        %883 = vmatprep.subr.mxu0 0.0
        %884 = vmatpush1.xpose.msra.mxu0 0.0
        %885 = vmatprep.subr.mxu0 0.0
        %886 = vmatpush1.xpose.msra.mxu0 0.0
        %887 = vmatprep.subr.mxu0 0.0
        %888 = vmatpush1.xpose.msra.mxu0 0.0
        %889 = vmatprep.subr.mxu0 0.0
        %890 = vmatpush1.xpose.msra.mxu0 %v859
        %891 = vmatprep.subr.mxu0 0.0
        %892 = vmatpush1.xpose.msra.mxu0 %v857
        %893 = vmatprep.subr.mxu0 0.0
        %894 = vmatpush2.xpose.msra.mxu0 0.0
        %895 = vmatprep.subr.mxu0 0.0
        %896 = vmatpush2.xpose.msra.mxu0 0.0
        %897 = vmatprep.subr.mxu0 0.0
        %898 = vmatpush2.xpose.msra.mxu0 0.0
        %899 = vmatprep.subr.mxu0 0.0
        %900 = vmatpush2.xpose.msra.mxu0 0.0
        %901 = vmatprep.subr.mxu0 0.0
        %902 = vmatpush2.xpose.msra.mxu0 0.0
        %903 = vmatprep.subr.mxu0 0.0
        %904 = vmatpush2.xpose.msra.mxu0 0.0
        %905 = vmatprep.subr.mxu0 0.0
        %906 = vmatpush2.xpose.msra.mxu0 0.0
        %907 = vmatprep.subr.mxu0 0.0
        %908 = vmatpush2.xpose.msra.mxu0 0.0
        %909 = vmatprep.subr.mxu0 0.0
        %910 = vmatpush2.xpose.msra.mxu0 0.0
        %911 = vmatprep.subr.mxu0 0.0
        %912 = vmatpush2.xpose.msra.mxu0 0.0
        %913 = vmatprep.subr.mxu0 0.0
        %914 = vmatpush2.xpose.msra.mxu0 0.0
        %915 = vmatprep.subr.mxu0 0.0
        %916 = vmatpush2.xpose.msra.mxu0 0.0
        %917 = vmatprep.subr.mxu0 0.0
        %918 = vmatpush2.xpose.msra.mxu0 0.0
        %919 = vmatprep.subr.mxu0 0.0
        %920 = vmatpush2.xpose.msra.mxu0 0.0
        %921 = vmatprep.subr.mxu0 0.0
        %922 = vmatpush2.xpose.msra.mxu0 0.0
        %923 = vmatprep.subr.mxu0 0.0
        %924 = vmatpush2.xpose.msra.mxu0 0.0
        %925 = vmatprep.mubr.f32.mxu0 0.0
        %926 = vmatmul.mubr.f32.gmra.mxu0 %v855
        %v927 = vpop.f32.mrf.mxu0
        %v928 = vadd.f32 0.0, %v927
        %v929 = vpop.f32.mrf.mxu0
        %930 = vdwg.mxu0
        %v931 = vsel %vm757, %v928, -inf
        %932 = vmax.xlane.f32.xlu0 %v931
        %v933 = vpop.xlane.xlu0 %932
        %v934 = vsub.f32 %v928, %v933
        %v935 = vmul.f32 %v934, 1.442695
        %v936 = vpow.pop %v935
        %v937 = vsel %vm757, %v936, 0.0
        %938 = vadd.xlane.f32.xlu0 %v937
        %v939 = vpop.xlane.xlu0 %938
        %v940 = vrcp.pop %v939
        %941 = vrot.lane.b32.xlu0 %v669, 88
        %v942 = vpop.permute.xlu0 %941
        %943 = vrot.lane.b32.xlu0 %v674, 88
        %v944 = vpop.permute.xlu0 %943
        %v948 = vsel %vm757, %v936, 0
        %950 = vmatprep.subr.mxu0 0.0
        %951 = vmatpush1.msra.mxu0 0.0
        %952 = vmatprep.subr.mxu0 0.0
        %953 = vmatpush1.msra.mxu0 0.0
        %954 = vmatprep.subr.mxu0 0.0
        %955 = vmatpush1.msra.mxu0 0.0
        %956 = vmatprep.subr.mxu0 0.0
        %957 = vmatpush1.msra.mxu0 0.0
        %958 = vmatprep.subr.mxu0 0.0
        %959 = vmatpush1.msra.mxu0 0.0
        %960 = vmatprep.subr.mxu0 0.0
        %961 = vmatpush1.msra.mxu0 0.0
        %962 = vmatprep.subr.mxu0 0.0
        %963 = vmatpush1.msra.mxu0 0.0
        %964 = vmatprep.subr.mxu0 0.0
        %965 = vmatpush1.msra.mxu0 0.0
        %966 = vmatprep.subr.mxu0 0.0
        %967 = vmatpush1.msra.mxu0 0.0
        %968 = vmatprep.subr.mxu0 0.0
        %969 = vmatpush1.msra.mxu0 0.0
        %970 = vmatprep.subr.mxu0 0.0
        %971 = vmatpush1.msra.mxu0 0.0
        %972 = vmatprep.subr.mxu0 0.0
        %973 = vmatpush1.msra.mxu0 0.0
        %974 = vmatprep.subr.mxu0 0.0
        %975 = vmatpush1.msra.mxu0 0.0
        %976 = vmatprep.subr.mxu0 0.0
        %977 = vmatpush1.msra.mxu0 0.0
        %978 = vmatprep.subr.mxu0 0.0
        %979 = vmatpush1.msra.mxu0 %v944
        %980 = vmatprep.subr.mxu0 0.0
        %981 = vmatpush1.msra.mxu0 %v942
        %982 = vmatprep.subr.mxu0 0.0
        %983 = vmatpush2.msra.mxu0 0.0
        %984 = vmatprep.subr.mxu0 0.0
        %985 = vmatpush2.msra.mxu0 0.0
        %986 = vmatprep.subr.mxu0 0.0
        %987 = vmatpush2.msra.mxu0 0.0
        %988 = vmatprep.subr.mxu0 0.0
        %989 = vmatpush2.msra.mxu0 0.0
        %990 = vmatprep.subr.mxu0 0.0
        %991 = vmatpush2.msra.mxu0 0.0
        %992 = vmatprep.subr.mxu0 0.0
        %993 = vmatpush2.msra.mxu0 0.0
        %994 = vmatprep.subr.mxu0 0.0
        %995 = vmatpush2.msra.mxu0 0.0
        %996 = vmatprep.subr.mxu0 0.0
        %997 = vmatpush2.msra.mxu0 0.0
        %998 = vmatprep.subr.mxu0 0.0
        %999 = vmatpush2.msra.mxu0 0.0
        %1000 = vmatprep.subr.mxu0 0.0
        %1001 = vmatpush2.msra.mxu0 0.0
        %1002 = vmatprep.subr.mxu0 0.0
        %1003 = vmatpush2.msra.mxu0 0.0
        %1004 = vmatprep.subr.mxu0 0.0
        %1005 = vmatpush2.msra.mxu0 0.0
        %1006 = vmatprep.subr.mxu0 0.0
        %1007 = vmatpush2.msra.mxu0 0.0
        %1008 = vmatprep.subr.mxu0 0.0
        %1009 = vmatpush2.msra.mxu0 0.0
        %1010 = vmatprep.subr.mxu0 0.0
        %1011 = vmatpush2.msra.mxu0 0.0
        %1012 = vmatprep.subr.mxu0 0.0
        %1013 = vmatpush2.msra.mxu0 0.0
        %1014 = vmatprep.mubr.f32.mxu0 0.0
        %1015 = vmatmul.mubr.f32.gmra.mxu0 %v948
        %v1016 = vpop.f32.mrf.mxu0
        %v1017 = vadd.f32 0.0, %v1016
        %v1018 = vpop.f32.mrf.mxu0
        %1019 = vdwg.mxu0
        %v1020 = vmul.f32 %v1017, %v940
        %1022 = vrot.lane.b32.xlu0 %v1020, 8
        %v1023 = vpop.permute.xlu0 %1022
        %vm1025 = vcmask 130112
        %1026 = vst.msk [vmem:[#allocation2] sm:$0xff] %vm1025, %v1023
        %1027 = vrot.lane.b32.xlu0 %v584, 112
        %v1028 = vpop.permute.xlu0 %1027
        %1029 = vrot.lane.b32.xlu0 %v669, 112
        %v1030 = vpop.permute.xlu0 %1029
        %1031 = vrot.lane.b32.xlu0 %v674, 112
        %v1032 = vpop.permute.xlu0 %1031
        %v1033 = vsel %vm677, %v1028, 0
        %v1035 = vsel %vm677, %v1030, 0
        %v1037 = vsel %vm677, %v1032, 0
        %1039 = vmatprep.subr.mxu0 0.0
        %1040 = vmatpush1.xpose.msra.mxu0 0.0
        %1041 = vmatprep.subr.mxu0 0.0
        %1042 = vmatpush1.xpose.msra.mxu0 0.0
        %1043 = vmatprep.subr.mxu0 0.0
        %1044 = vmatpush1.xpose.msra.mxu0 0.0
        %1045 = vmatprep.subr.mxu0 0.0
        %1046 = vmatpush1.xpose.msra.mxu0 0.0
        %1047 = vmatprep.subr.mxu0 0.0
        %1048 = vmatpush1.xpose.msra.mxu0 0.0
        %1049 = vmatprep.subr.mxu0 0.0
        %1050 = vmatpush1.xpose.msra.mxu0 0.0
        %1051 = vmatprep.subr.mxu0 0.0
        %1052 = vmatpush1.xpose.msra.mxu0 0.0
        %1053 = vmatprep.subr.mxu0 0.0
        %1054 = vmatpush1.xpose.msra.mxu0 0.0
        %1055 = vmatprep.subr.mxu0 0.0
        %1056 = vmatpush1.xpose.msra.mxu0 0.0
        %1057 = vmatprep.subr.mxu0 0.0
        %1058 = vmatpush1.xpose.msra.mxu0 0.0
        %1059 = vmatprep.subr.mxu0 0.0
        %1060 = vmatpush1.xpose.msra.mxu0 0.0
        %1061 = vmatprep.subr.mxu0 0.0
        %1062 = vmatpush1.xpose.msra.mxu0 0.0
        %1063 = vmatprep.subr.mxu0 0.0
        %1064 = vmatpush1.xpose.msra.mxu0 0.0
        %1065 = vmatprep.subr.mxu0 0.0
        %1066 = vmatpush1.xpose.msra.mxu0 0.0
        %1067 = vmatprep.subr.mxu0 0.0
        %1068 = vmatpush1.xpose.msra.mxu0 %v1037
        %1069 = vmatprep.subr.mxu0 0.0
        %1070 = vmatpush1.xpose.msra.mxu0 %v1035
        %1071 = vmatprep.subr.mxu0 0.0
        %1072 = vmatpush2.xpose.msra.mxu0 0.0
        %1073 = vmatprep.subr.mxu0 0.0
        %1074 = vmatpush2.xpose.msra.mxu0 0.0
        %1075 = vmatprep.subr.mxu0 0.0
        %1076 = vmatpush2.xpose.msra.mxu0 0.0
        %1077 = vmatprep.subr.mxu0 0.0
        %1078 = vmatpush2.xpose.msra.mxu0 0.0
        %1079 = vmatprep.subr.mxu0 0.0
        %1080 = vmatpush2.xpose.msra.mxu0 0.0
        %1081 = vmatprep.subr.mxu0 0.0
        %1082 = vmatpush2.xpose.msra.mxu0 0.0
        %1083 = vmatprep.subr.mxu0 0.0
        %1084 = vmatpush2.xpose.msra.mxu0 0.0
        %1085 = vmatprep.subr.mxu0 0.0
        %1086 = vmatpush2.xpose.msra.mxu0 0.0
        %1087 = vmatprep.subr.mxu0 0.0
        %1088 = vmatpush2.xpose.msra.mxu0 0.0
        %1089 = vmatprep.subr.mxu0 0.0
        %1090 = vmatpush2.xpose.msra.mxu0 0.0
        %1091 = vmatprep.subr.mxu0 0.0
        %1092 = vmatpush2.xpose.msra.mxu0 0.0
        %1093 = vmatprep.subr.mxu0 0.0
        %1094 = vmatpush2.xpose.msra.mxu0 0.0
        %1095 = vmatprep.subr.mxu0 0.0
        %1096 = vmatpush2.xpose.msra.mxu0 0.0
        %1097 = vmatprep.subr.mxu0 0.0
        %1098 = vmatpush2.xpose.msra.mxu0 0.0
        %1099 = vmatprep.subr.mxu0 0.0
        %1100 = vmatpush2.xpose.msra.mxu0 0.0
        %1101 = vmatprep.subr.mxu0 0.0
        %1102 = vmatpush2.xpose.msra.mxu0 0.0
        %1103 = vmatprep.mubr.f32.mxu0 0.0
        %1104 = vmatmul.mubr.f32.gmra.mxu0 %v1033
        %v1105 = vpop.f32.mrf.mxu0
        %v1106 = vadd.f32 0.0, %v1105
        %v1107 = vpop.f32.mrf.mxu0
        %1108 = vdwg.mxu0
        %v1109 = vsel %vm757, %v1106, -inf
        %1110 = vmax.xlane.f32.xlu0 %v1109
        %v1111 = vpop.xlane.xlu0 %1110
        %v1112 = vsub.f32 %v1106, %v1111
        %v1113 = vmul.f32 %v1112, 1.442695
        %v1114 = vpow.pop %v1113
        %v1115 = vsel %vm757, %v1114, 0.0
        %1116 = vadd.xlane.f32.xlu0 %v1115
        %v1117 = vpop.xlane.xlu0 %1116
        %v1118 = vrcp.pop %v1117
        %1119 = vrot.lane.b32.xlu0 %v669, 80
        %v1120 = vpop.permute.xlu0 %1119
        %1121 = vrot.lane.b32.xlu0 %v674, 80
        %v1122 = vpop.permute.xlu0 %1121
        %v1126 = vsel %vm757, %v1114, 0
        %1128 = vmatprep.subr.mxu0 0.0
        %1129 = vmatpush1.msra.mxu0 0.0
        %1130 = vmatprep.subr.mxu0 0.0
        %1131 = vmatpush1.msra.mxu0 0.0
        %1132 = vmatprep.subr.mxu0 0.0
        %1133 = vmatpush1.msra.mxu0 0.0
        %1134 = vmatprep.subr.mxu0 0.0
        %1135 = vmatpush1.msra.mxu0 0.0
        %1136 = vmatprep.subr.mxu0 0.0
        %1137 = vmatpush1.msra.mxu0 0.0
        %1138 = vmatprep.subr.mxu0 0.0
        %1139 = vmatpush1.msra.mxu0 0.0
        %1140 = vmatprep.subr.mxu0 0.0
        %1141 = vmatpush1.msra.mxu0 0.0
        %1142 = vmatprep.subr.mxu0 0.0
        %1143 = vmatpush1.msra.mxu0 0.0
        %1144 = vmatprep.subr.mxu0 0.0
        %1145 = vmatpush1.msra.mxu0 0.0
        %1146 = vmatprep.subr.mxu0 0.0
        %1147 = vmatpush1.msra.mxu0 0.0
        %1148 = vmatprep.subr.mxu0 0.0
        %1149 = vmatpush1.msra.mxu0 0.0
        %1150 = vmatprep.subr.mxu0 0.0
        %1151 = vmatpush1.msra.mxu0 0.0
        %1152 = vmatprep.subr.mxu0 0.0
        %1153 = vmatpush1.msra.mxu0 0.0
        %1154 = vmatprep.subr.mxu0 0.0
        %1155 = vmatpush1.msra.mxu0 0.0
        %1156 = vmatprep.subr.mxu0 0.0
        %1157 = vmatpush1.msra.mxu0 %v1122
        %1158 = vmatprep.subr.mxu0 0.0
        %1159 = vmatpush1.msra.mxu0 %v1120
        %1160 = vmatprep.subr.mxu0 0.0
        %1161 = vmatpush2.msra.mxu0 0.0
        %1162 = vmatprep.subr.mxu0 0.0
        %1163 = vmatpush2.msra.mxu0 0.0
        %1164 = vmatprep.subr.mxu0 0.0
        %1165 = vmatpush2.msra.mxu0 0.0
        %1166 = vmatprep.subr.mxu0 0.0
        %1167 = vmatpush2.msra.mxu0 0.0
        %1168 = vmatprep.subr.mxu0 0.0
        %1169 = vmatpush2.msra.mxu0 0.0
        %1170 = vmatprep.subr.mxu0 0.0
        %1171 = vmatpush2.msra.mxu0 0.0
        %1172 = vmatprep.subr.mxu0 0.0
        %1173 = vmatpush2.msra.mxu0 0.0
        %1174 = vmatprep.subr.mxu0 0.0
        %1175 = vmatpush2.msra.mxu0 0.0
        %1176 = vmatprep.subr.mxu0 0.0
        %1177 = vmatpush2.msra.mxu0 0.0
        %1178 = vmatprep.subr.mxu0 0.0
        %1179 = vmatpush2.msra.mxu0 0.0
        %1180 = vmatprep.subr.mxu0 0.0
        %1181 = vmatpush2.msra.mxu0 0.0
        %1182 = vmatprep.subr.mxu0 0.0
        %1183 = vmatpush2.msra.mxu0 0.0
        %1184 = vmatprep.subr.mxu0 0.0
        %1185 = vmatpush2.msra.mxu0 0.0
        %1186 = vmatprep.subr.mxu0 0.0
        %1187 = vmatpush2.msra.mxu0 0.0
        %1188 = vmatprep.subr.mxu0 0.0
        %1189 = vmatpush2.msra.mxu0 0.0
        %1190 = vmatprep.subr.mxu0 0.0
        %1191 = vmatpush2.msra.mxu0 0.0
        %1192 = vmatprep.mubr.f32.mxu0 0.0
        %1193 = vmatmul.mubr.f32.gmra.mxu0 %v1126
        %v1194 = vpop.f32.mrf.mxu0
        %v1195 = vadd.f32 0.0, %v1194
        %v1196 = vpop.f32.mrf.mxu0
        %1197 = vdwg.mxu0
        %v1198 = vmul.f32 %v1195, %v1118
        %1200 = vrot.lane.b32.xlu0 %v1198, 16
        %v1201 = vpop.permute.xlu0 %1200
        %vm1203 = vcmask 195712
        %1204 = vst.msk [vmem:[#allocation2] sm:$0xff] %vm1203, %v1201
        %1205 = vrot.lane.b32.xlu0 %v584, 104
        %v1206 = vpop.permute.xlu0 %1205
        %1207 = vrot.lane.b32.xlu0 %v669, 104
        %v1208 = vpop.permute.xlu0 %1207
        %1209 = vrot.lane.b32.xlu0 %v674, 104
        %v1210 = vpop.permute.xlu0 %1209
        %v1211 = vsel %vm677, %v1206, 0
        %v1213 = vsel %vm677, %v1208, 0
        %v1215 = vsel %vm677, %v1210, 0
        %1217 = vmatprep.subr.mxu0 0.0
        %1218 = vmatpush1.xpose.msra.mxu0 0.0
        %1219 = vmatprep.subr.mxu0 0.0
        %1220 = vmatpush1.xpose.msra.mxu0 0.0
        %1221 = vmatprep.subr.mxu0 0.0
        %1222 = vmatpush1.xpose.msra.mxu0 0.0
        %1223 = vmatprep.subr.mxu0 0.0
        %1224 = vmatpush1.xpose.msra.mxu0 0.0
        %1225 = vmatprep.subr.mxu0 0.0
        %1226 = vmatpush1.xpose.msra.mxu0 0.0
        %1227 = vmatprep.subr.mxu0 0.0
        %1228 = vmatpush1.xpose.msra.mxu0 0.0
        %1229 = vmatprep.subr.mxu0 0.0
        %1230 = vmatpush1.xpose.msra.mxu0 0.0
        %1231 = vmatprep.subr.mxu0 0.0
        %1232 = vmatpush1.xpose.msra.mxu0 0.0
        %1233 = vmatprep.subr.mxu0 0.0
        %1234 = vmatpush1.xpose.msra.mxu0 0.0
        %1235 = vmatprep.subr.mxu0 0.0
        %1236 = vmatpush1.xpose.msra.mxu0 0.0
        %1237 = vmatprep.subr.mxu0 0.0
        %1238 = vmatpush1.xpose.msra.mxu0 0.0
        %1239 = vmatprep.subr.mxu0 0.0
        %1240 = vmatpush1.xpose.msra.mxu0 0.0
        %1241 = vmatprep.subr.mxu0 0.0
        %1242 = vmatpush1.xpose.msra.mxu0 0.0
        %1243 = vmatprep.subr.mxu0 0.0
        %1244 = vmatpush1.xpose.msra.mxu0 0.0
        %1245 = vmatprep.subr.mxu0 0.0
        %1246 = vmatpush1.xpose.msra.mxu0 %v1215
        %1247 = vmatprep.subr.mxu0 0.0
        %1248 = vmatpush1.xpose.msra.mxu0 %v1213
        %1249 = vmatprep.subr.mxu0 0.0
        %1250 = vmatpush2.xpose.msra.mxu0 0.0
        %1251 = vmatprep.subr.mxu0 0.0
        %1252 = vmatpush2.xpose.msra.mxu0 0.0
        %1253 = vmatprep.subr.mxu0 0.0
        %1254 = vmatpush2.xpose.msra.mxu0 0.0
        %1255 = vmatprep.subr.mxu0 0.0
        %1256 = vmatpush2.xpose.msra.mxu0 0.0
        %1257 = vmatprep.subr.mxu0 0.0
        %1258 = vmatpush2.xpose.msra.mxu0 0.0
        %1259 = vmatprep.subr.mxu0 0.0
        %1260 = vmatpush2.xpose.msra.mxu0 0.0
        %1261 = vmatprep.subr.mxu0 0.0
        %1262 = vmatpush2.xpose.msra.mxu0 0.0
        %1263 = vmatprep.subr.mxu0 0.0
        %1264 = vmatpush2.xpose.msra.mxu0 0.0
        %1265 = vmatprep.subr.mxu0 0.0
        %1266 = vmatpush2.xpose.msra.mxu0 0.0
        %1267 = vmatprep.subr.mxu0 0.0
        %1268 = vmatpush2.xpose.msra.mxu0 0.0
        %1269 = vmatprep.subr.mxu0 0.0
        %1270 = vmatpush2.xpose.msra.mxu0 0.0
        %1271 = vmatprep.subr.mxu0 0.0
        %1272 = vmatpush2.xpose.msra.mxu0 0.0
        %1273 = vmatprep.subr.mxu0 0.0
        %1274 = vmatpush2.xpose.msra.mxu0 0.0
        %1275 = vmatprep.subr.mxu0 0.0
        %1276 = vmatpush2.xpose.msra.mxu0 0.0
        %1277 = vmatprep.subr.mxu0 0.0
        %1278 = vmatpush2.xpose.msra.mxu0 0.0
        %1279 = vmatprep.subr.mxu0 0.0
        %1280 = vmatpush2.xpose.msra.mxu0 0.0
        %1281 = vmatprep.mubr.f32.mxu0 0.0
        %1282 = vmatmul.mubr.f32.gmra.mxu0 %v1211
        %v1283 = vpop.f32.mrf.mxu0
        %v1284 = vadd.f32 0.0, %v1283
        %v1285 = vpop.f32.mrf.mxu0
        %1286 = vdwg.mxu0
        %v1287 = vsel %vm757, %v1284, -inf
        %1288 = vmax.xlane.f32.xlu0 %v1287
        %v1289 = vpop.xlane.xlu0 %1288
        %v1290 = vsub.f32 %v1284, %v1289
        %v1291 = vmul.f32 %v1290, 1.442695
        %v1292 = vpow.pop %v1291
        %v1293 = vsel %vm757, %v1292, 0.0
        %1294 = vadd.xlane.f32.xlu0 %v1293
        %v1295 = vpop.xlane.xlu0 %1294
        %v1296 = vrcp.pop %v1295
        %1297 = vrot.lane.b32.xlu0 %v669, 72
        %v1298 = vpop.permute.xlu0 %1297
        %1299 = vrot.lane.b32.xlu0 %v674, 72
        %v1300 = vpop.permute.xlu0 %1299
        %v1304 = vsel %vm757, %v1292, 0
        %1306 = vmatprep.subr.mxu0 0.0
        %1307 = vmatpush1.msra.mxu0 0.0
        %1308 = vmatprep.subr.mxu0 0.0
        %1309 = vmatpush1.msra.mxu0 0.0
        %1310 = vmatprep.subr.mxu0 0.0
        %1311 = vmatpush1.msra.mxu0 0.0
        %1312 = vmatprep.subr.mxu0 0.0
        %1313 = vmatpush1.msra.mxu0 0.0
        %1314 = vmatprep.subr.mxu0 0.0
        %1315 = vmatpush1.msra.mxu0 0.0
        %1316 = vmatprep.subr.mxu0 0.0
        %1317 = vmatpush1.msra.mxu0 0.0
        %1318 = vmatprep.subr.mxu0 0.0
        %1319 = vmatpush1.msra.mxu0 0.0
        %1320 = vmatprep.subr.mxu0 0.0
        %1321 = vmatpush1.msra.mxu0 0.0
        %1322 = vmatprep.subr.mxu0 0.0
        %1323 = vmatpush1.msra.mxu0 0.0
        %1324 = vmatprep.subr.mxu0 0.0
        %1325 = vmatpush1.msra.mxu0 0.0
        %1326 = vmatprep.subr.mxu0 0.0
        %1327 = vmatpush1.msra.mxu0 0.0
        %1328 = vmatprep.subr.mxu0 0.0
        %1329 = vmatpush1.msra.mxu0 0.0
        %1330 = vmatprep.subr.mxu0 0.0
        %1331 = vmatpush1.msra.mxu0 0.0
        %1332 = vmatprep.subr.mxu0 0.0
        %1333 = vmatpush1.msra.mxu0 0.0
        %1334 = vmatprep.subr.mxu0 0.0
        %1335 = vmatpush1.msra.mxu0 %v1300
        %1336 = vmatprep.subr.mxu0 0.0
        %1337 = vmatpush1.msra.mxu0 %v1298
        %1338 = vmatprep.subr.mxu0 0.0
        %1339 = vmatpush2.msra.mxu0 0.0
        %1340 = vmatprep.subr.mxu0 0.0
        %1341 = vmatpush2.msra.mxu0 0.0
        %1342 = vmatprep.subr.mxu0 0.0
        %1343 = vmatpush2.msra.mxu0 0.0
        %1344 = vmatprep.subr.mxu0 0.0
        %1345 = vmatpush2.msra.mxu0 0.0
        %1346 = vmatprep.subr.mxu0 0.0
        %1347 = vmatpush2.msra.mxu0 0.0
        %1348 = vmatprep.subr.mxu0 0.0
        %1349 = vmatpush2.msra.mxu0 0.0
        %1350 = vmatprep.subr.mxu0 0.0
        %1351 = vmatpush2.msra.mxu0 0.0
        %1352 = vmatprep.subr.mxu0 0.0
        %1353 = vmatpush2.msra.mxu0 0.0
        %1354 = vmatprep.subr.mxu0 0.0
        %1355 = vmatpush2.msra.mxu0 0.0
        %1356 = vmatprep.subr.mxu0 0.0
        %1357 = vmatpush2.msra.mxu0 0.0
        %1358 = vmatprep.subr.mxu0 0.0
        %1359 = vmatpush2.msra.mxu0 0.0
        %1360 = vmatprep.subr.mxu0 0.0
        %1361 = vmatpush2.msra.mxu0 0.0
        %1362 = vmatprep.subr.mxu0 0.0
        %1363 = vmatpush2.msra.mxu0 0.0
        %1364 = vmatprep.subr.mxu0 0.0
        %1365 = vmatpush2.msra.mxu0 0.0
        %1366 = vmatprep.subr.mxu0 0.0
        %1367 = vmatpush2.msra.mxu0 0.0
        %1368 = vmatprep.subr.mxu0 0.0
        %1369 = vmatpush2.msra.mxu0 0.0
        %1370 = vmatprep.mubr.f32.mxu0 0.0
        %1371 = vmatmul.mubr.f32.gmra.mxu0 %v1304
        %v1372 = vpop.f32.mrf.mxu0
        %v1373 = vadd.f32 0.0, %v1372
        %v1374 = vpop.f32.mrf.mxu0
        %1375 = vdwg.mxu0
        %v1376 = vmul.f32 %v1373, %v1296
        %1378 = vrot.lane.b32.xlu0 %v1376, 24
        %v1379 = vpop.permute.xlu0 %1378
        %vm1381 = vcmask 261312
        %1382 = vst.msk [vmem:[#allocation2] sm:$0xff] %vm1381, %v1379
        %v1383 = vld [vmem:[#allocation2] sm:$0xff]
        %v1384 = vld [vmem:[%s9] sm:$0x1]
        %v1386 = vlaneseq
        %v1387 = vshrl.u32 %v1386, 7
        %v1388 = vsub.s32 0, %v1387
        %v1389 = vrot.slane %v1384, %v1388
        %v1391 = vadd.f32 %v459, %v1389
        %v1392 = vld [vmem:[#allocation11] sm:$0xff]
        %v1393 = vld [vmem:[#allocation11 + $0x8] sm:$0xff]
        %v1394 = vld [vmem:[#allocation11 + $0x10] sm:$0xff]
        %v1395 = vld [vmem:[#allocation11 + $0x18] sm:$0xff]
        %v1397 = vsel %vm462, %v1383, 0
        %1399 = vmatprep.subr.mxu0 0.0
        %1400 = vmatpush1.msra.mxu0 0.0
        %1401 = vmatprep.subr.mxu0 0.0
        %1402 = vmatpush1.msra.mxu0 0.0
        %1403 = vmatprep.subr.mxu0 0.0
        %1404 = vmatpush1.msra.mxu0 0.0
        %1405 = vmatprep.subr.mxu0 0.0
        %1406 = vmatpush1.msra.mxu0 0.0
        %1407 = vmatprep.subr.mxu0 0.0
        %1408 = vmatpush1.msra.mxu0 0.0
        %1409 = vmatprep.subr.mxu0 0.0
        %1410 = vmatpush1.msra.mxu0 0.0
        %1411 = vmatprep.subr.mxu0 0.0
        %1412 = vmatpush1.msra.mxu0 0.0
        %1413 = vmatprep.subr.mxu0 0.0
        %1414 = vmatpush1.msra.mxu0 0.0
        %1415 = vmatprep.subr.mxu0 0.0
        %1416 = vmatpush1.msra.mxu0 0.0
        %1417 = vmatprep.subr.mxu0 0.0
        %1418 = vmatpush1.msra.mxu0 0.0
        %1419 = vmatprep.subr.mxu0 0.0
        %1420 = vmatpush1.msra.mxu0 0.0
        %1421 = vmatprep.subr.mxu0 0.0
        %1422 = vmatpush1.msra.mxu0 0.0
        %1423 = vmatprep.subr.mxu0 0.0
        %1424 = vmatpush1.msra.mxu0 %v1395
        %1425 = vmatprep.subr.mxu0 0.0
        %1426 = vmatpush1.msra.mxu0 %v1394
        %1427 = vmatprep.subr.mxu0 0.0
        %1428 = vmatpush1.msra.mxu0 %v1393
        %1429 = vmatprep.subr.mxu0 0.0
        %1430 = vmatpush1.msra.mxu0 %v1392
        %1431 = vmatprep.subr.mxu0 0.0
        %1432 = vmatpush2.msra.mxu0 0.0
        %1433 = vmatprep.subr.mxu0 0.0
        %1434 = vmatpush2.msra.mxu0 0.0
        %1435 = vmatprep.subr.mxu0 0.0
        %1436 = vmatpush2.msra.mxu0 0.0
        %1437 = vmatprep.subr.mxu0 0.0
        %1438 = vmatpush2.msra.mxu0 0.0
        %1439 = vmatprep.subr.mxu0 0.0
        %1440 = vmatpush2.msra.mxu0 0.0
        %1441 = vmatprep.subr.mxu0 0.0
        %1442 = vmatpush2.msra.mxu0 0.0
        %1443 = vmatprep.subr.mxu0 0.0
        %1444 = vmatpush2.msra.mxu0 0.0
        %1445 = vmatprep.subr.mxu0 0.0
        %1446 = vmatpush2.msra.mxu0 0.0
        %1447 = vmatprep.subr.mxu0 0.0
        %1448 = vmatpush2.msra.mxu0 0.0
        %1449 = vmatprep.subr.mxu0 0.0
        %1450 = vmatpush2.msra.mxu0 0.0
        %1451 = vmatprep.subr.mxu0 0.0
        %1452 = vmatpush2.msra.mxu0 0.0
        %1453 = vmatprep.subr.mxu0 0.0
        %1454 = vmatpush2.msra.mxu0 0.0
        %1455 = vmatprep.subr.mxu0 0.0
        %1456 = vmatpush2.msra.mxu0 0.0
        %1457 = vmatprep.subr.mxu0 0.0
        %1458 = vmatpush2.msra.mxu0 0.0
        %1459 = vmatprep.subr.mxu0 0.0
        %1460 = vmatpush2.msra.mxu0 0.0
        %1461 = vmatprep.subr.mxu0 0.0
        %1462 = vmatpush2.msra.mxu0 0.0
        %1463 = vmatprep.mubr.f32.mxu0 0.0
        %1464 = vmatmul.mubr.f32.gmra.mxu0 %v1397
        %v1465 = vpop.f32.mrf.mxu0
        %v1466 = vadd.f32 0.0, %v1465
        %v1467 = vpop.f32.mrf.mxu0
        %1468 = vdwg.mxu0
        %v1469 = vadd.f32 %v1391, %v1466
        %1470 = vst.msk [vmem:[%s457] sm:$0xff] %vm462, %v1469
        %s1471 = sand.u32 %s259, 1
        %s1472 = scalar_lea.sflag [#allocation5], %s1471
        %s1473 = sand.u32 %s259, 1
        %s1474 = smul.addr %s1473, 8
        %s1475 = scalar_lea.vmem [#allocation12], %s1474
        // Predicated region
        $region81: #{tpu_custom_call.1} parent=59 // pred_check
          %p1476 = pneg %p269
        $region82: #{tpu_custom_call.1} parent=59 // pred_check_branch
          %1478 = sbr.rel (%p1476) target = $region84
        $region83: #{tpu_custom_call.1} parent=59 // pred_region
          %s1480 = ssub.s32 128, 128
          %1481 = vsyncadd %s1472, %s1480
          %s1482 = smul.addr %s31, 128
          %s1483 = scalar_lea.hbm %s10, %s1482
          %s1485 = sshll.u32 %s1475, 4
          %s1486 = int_to_ptr.vmem [resolvable:$true] %s1485
          %1488 = dma.vmem_to_hbm [thread:$0]  %s1486, 128, %s1483, %s1472
        $region84: #{tpu_custom_call.1} parent=59 // pred_fallthru
          _
      $region60: #{tpu_custom_call.1} parent=5 // pred_fallthru
        _
      %p1489 = scmp.le.s32.totalorder 2, %s26
      // Predicated region
      $region85: #{tpu_custom_call.1} parent=5 // pred_check
        %p1490 = pneg %p1489
      $region86: #{tpu_custom_call.1} parent=5 // pred_check_branch
        %1492 = sbr.rel (%p1490) target = $region88
      $region87: #{tpu_custom_call.1} parent=5 // pred_region
        %s1493 = ssub.s32 %s26, 2
        // Predicated region
        $region89: #{tpu_custom_call.1} parent=87 // pred_check
          %p1494 = pneg %p275
        $region90: #{tpu_custom_call.1} parent=87 // pred_check_branch
          %1496 = sbr.rel (%p1494) target = $region92
        $region91: #{tpu_custom_call.1} parent=87 // pred_region
          %s1497 = sand.u32 %s260, 1
          %s1498 = scalar_lea.sflag [#allocation5], %s1497
          %s1499 = sand.u32 %s260, 1
          %s1500 = smul.addr %s1499, 8
          %s1501 = scalar_lea.vmem [#allocation12], %s1500
          %1502 = dma.done %s1498, 128
        $region92: #{tpu_custom_call.1} parent=87 // pred_fallthru
          _
      $region88: #{tpu_custom_call.1} parent=5 // pred_fallthru
        _
    $region6: #{tpu_custom_call.1} parent=1 // loop_footer
      %s30 = sadd.s32 1, %s26
    $region7: #{tpu_custom_call.1} parent=1 // loop_footer_branch
      %25 = sbr.rel target = $region3
    $region8: #{tpu_custom_call.1} parent=1 // loop_exit
      _
    %1503 = vsyncpa [#allocation4], 1
    %s1504 = scalar_lea.sflag [#allocation4], 1
    %1505 = vsyncpa %s1504, 1
    %1506 = vsyncpa [#allocation7], 1
    %s1507 = scalar_lea.sflag [#allocation7], 1
    %1508 = vsyncpa %s1507, 1
    %1509 = vsyncpa [#allocation10], 1
    %1510 = vsyncpa [#allocation5], 1
    %s1511 = scalar_lea.sflag [#allocation5], 1
    %1512 = vsyncpa %s1511, 1

</llo_original>
